<compile_context>
chip_gen: v7x
topology: tpu7x:2x2x1
jax: 0.10.0
libtpu: 0.0.40
codegen_flags: <defaults>
</compile_context>

<pallas_src>
import functools

import jax
import jax.numpy as jnp
from jax.experimental import pallas as pl
from jax.experimental.pallas import tpu as pltpu

# ---------------- hyperparameters (small, consistent with the module) -------
N_CONV = 2
N_CHANNELS = 4
KERNEL_SIZE = 3
N_NONLINEAR = 2
P = 8
TWO_P = 2 * P
SEQ_LEN = 101
IN_CHANNELS = 3
LANE_PAD = 128          # sequence length padded to the 128-lane vreg width
BATCH = 2
BATCH_TILE = 128        # rows per grid step once B grows past a single tile


# ------------------------------ fused kernel --------------------------------
def _make_fused_kernel(n_conv, conv_cin, n_channels, kernel_size, n_linear,
                       batch, lane_pad, seq_len, two_p):
    pad = kernel_size // 2

    def kernel(*refs):
        # refs = [x, (conv_w, conv_b)*n_conv, (lin_w, lin_b)*n_linear, out, xpad]
        x_ref = refs[0]
        idx = 1
        conv_refs = []
        for _ in range(n_conv):
            conv_refs.append((refs[idx], refs[idx + 1]))
            idx += 2
        lin_refs = []
        for _ in range(n_linear):
            lin_refs.append((refs[idx], refs[idx + 1]))
            idx += 2
        o_ref = refs[idx]
        xpad_ref = refs[idx + 1]            # VMEM scratch (C_in, batch, 128)

        # ---- fold the NCL -> lane-dense (C, B, 128) relayout into the kernel:
        # zero the scratch (gives both the lane padding and the conv halo),
        # then masked-store each channel's (B, 101) slice into lanes [0, 101).
        xpad_ref[...] = jnp.zeros_like(xpad_ref)
        for ci in range(conv_cin):
            xpad_ref[ci, :, :seq_len] = x_ref[:, ci, :]

        lane = jax.lax.broadcasted_iota(jnp.int32, (batch, lane_pad), 1)
        valid = lane < seq_len              # mask for the lane padding

        # ---- conv stack: channels kept as separate lane-dense (B, 128) slabs
        h = [xpad_ref[ci] for ci in range(conv_cin)]
        c_in = conv_cin
        for layer_i, (w_ref, b_ref) in enumerate(conv_refs):
            last_conv = layer_i == n_conv - 1
            # Hoist the shifted views once per input channel (reused by every
            # output channel).  Shifts go to the XLU, tanh to the EUP, the
            # MACs to the VALU slots -- all lane-dense.
            shifted = []
            for ci in range(c_in):
                taps = []
                for k in range(kernel_size):
                    s = k - pad             # out[:, l] reads in[:, l + s]
                    if s == 0:
                        taps.append(h[ci])
                    else:
                        # pltpu.roll needs shift >= 0; roll by (-s) mod 128.
                        taps.append(pltpu.roll(h[ci], shift=(-s) % lane_pad,
                                               axis=1))
                shifted.append(taps)
            new_h = []
            for co in range(n_channels):
                acc = jnp.zeros((batch, lane_pad), jnp.float32) + b_ref[co]
                for ci in range(c_in):
                    base = (co * c_in + ci) * kernel_size
                    for k in range(kernel_size):
                        acc = acc + w_ref[base + k] * shifted[ci][k]
                act = jnp.tanh(acc)
                # INVARIANT: lanes >= seq_len of every NON-final conv
                # activation must stay exactly zero (next layer's roll halo).
                # The final conv layer skips the mask: w1's zero rows for
                # l >= seq_len ignore those lanes and nothing rolls them.
                new_h.append(act if last_conv else jnp.where(valid, act, 0.0))
            h = new_h
            c_in = n_channels

        # ---- linear 1: PyTorch flatten of (B, C, L) folded into one flat
        # (C*128, 2p) weight (zero rows for l >= seq_len).  Channel slabs are
        # lane-concatenated (128-aligned) -> single K=C*128 MXU contraction.
        w1_ref, b1_ref = lin_refs[0]
        h_cat = jnp.concatenate(h, axis=1)                 # (B, C*128)
        z = jnp.tanh(jnp.dot(h_cat, w1_ref[...],
                             preferred_element_type=jnp.float32) + b1_ref[...])

        # ---- remaining linears (tanh on all but the last)
        for li in range(1, n_linear):
            w_ref, b_ref = lin_refs[li]
            acc = jnp.dot(z, w_ref[...],
                          preferred_element_type=jnp.float32) + b_ref[...]
            z = jnp.tanh(acc) if li < n_linear - 1 else acc

        o_ref[...] = z.astype(o_ref.dtype)

    return kernel


# ------------------------------ forward --------------------------------------
@functools.partial(jax.jit, static_argnames=("batch_tile",))
def branch_forward(x_ncl, kparams, *, batch_tile=BATCH_TILE):
    """x_ncl: (B, 3, 101) PyTorch NCL layout. Returns (B, 2p)."""
    B = x_ncl.shape[0]
    bt = B if B <= batch_tile else batch_tile
    n_tiles = pl.cdiv(B, bt)
    bp = n_tiles * bt

    xp = x_ncl.astype(jnp.float32)
    if bp != B:                              # only the large-batch grid path pads
        xp = jnp.pad(xp, ((0, bp - B), (0, 0), (0, 0)))

    inputs = [xp]
    in_specs = [pl.BlockSpec((bt, IN_CHANNELS, SEQ_LEN), lambda i: (i, 0, 0))]
    for (w, b) in kparams["conv"]:
        inputs += [w, b]                     # tiny scalar tables -> SMEM
        in_specs += [pl.BlockSpec(memory_space=pltpu.MemorySpace.SMEM),
                     pl.BlockSpec(memory_space=pltpu.MemorySpace.SMEM)]
    for (w, b) in kparams["linear"]:
        inputs += [w, b]                     # resident VMEM weights
        in_specs += [pl.BlockSpec(memory_space=pltpu.MemorySpace.VMEM),
                     pl.BlockSpec(memory_space=pltpu.MemorySpace.VMEM)]

    kernel = _make_fused_kernel(
        n_conv=len(kparams["conv"]), conv_cin=IN_CHANNELS,
        n_channels=N_CHANNELS, kernel_size=KERNEL_SIZE,
        n_linear=len(kparams["linear"]), batch=bt,
        lane_pad=LANE_PAD, seq_len=SEQ_LEN, two_p=TWO_P)

    out = pl.pallas_call(
        kernel,
        grid=(n_tiles,),
        in_specs=in_specs,
        out_specs=pl.BlockSpec((bt, TWO_P), lambda i: (i, 0)),
        out_shape=jax.ShapeDtypeStruct((bp, TWO_P), jnp.float32),
        scratch_shapes=[pltpu.VMEM((IN_CHANNELS, bt, LANE_PAD), jnp.float32)],
        # Batch tiles are independent -> parallel (uses both TCs on v7x; a
        # no-op on single-TC v5e/v6e).  VMEM use per step is << default limits
        # on every generation (incl. v7x's 64 MiB), so no vmem_limit override.
        compiler_params=pltpu.CompilerParams(
            dimension_semantics=("parallel",)),
    )(*inputs)
    return out[:B] if bp != B else out


# --------------------------- parameter init ----------------------------------
def init_params(key):
    """Synthetic init (uniform +/- 1/sqrt(fan_in), like PyTorch), canonical layout:
       conv w: (C_out, C_in, K), conv b: (C_out,)
       linear w: (in, out)  (i.e. PyTorch weight transposed), linear b: (1, out)."""
    params = {"conv": [], "linear": []}
    for i in range(N_CONV):
        c_in = IN_CHANNELS if i == 0 else N_CHANNELS
        key, kw, kb = jax.random.split(key, 3)
        bound = 1.0 / float((c_in * KERNEL_SIZE) ** 0.5)
        w = jax.random.uniform(kw, (N_CHANNELS, c_in, KERNEL_SIZE),
                               jnp.float32, -bound, bound)
        b = jax.random.uniform(kb, (N_CHANNELS,), jnp.float32, -bound, bound)
        params["conv"].append((w, b))

    n_hidden = N_CHANNELS * SEQ_LEN
    for i in range(N_NONLINEAR + 1):
        n_in = n_hidden if i == 0 else TWO_P
        key, kw, kb = jax.random.split(key, 3)
        bound = 1.0 / float(n_in ** 0.5)
        w = jax.random.uniform(kw, (n_in, TWO_P), jnp.float32, -bound, bound)
        b = jax.random.uniform(kb, (1, TWO_P), jnp.float32, -bound, bound)
        params["linear"].append((w, b))
    return params, key


def prepare_kernel_params(params):
    """One-time conversion of canonical params to the fused-kernel layout."""
    kparams = {"conv": [], "linear": []}
    for (w, b) in params["conv"]:
        # (C_out, C_in, K) -> flat SMEM vector indexed [((co*C_in)+ci)*K + k]
        kparams["conv"].append((w.reshape(-1), b))
    # First linear: fold the (B, C, L) flatten order into a flat channel-major
    # (C*128, 2p) weight; lane-pad rows (l >= SEQ_LEN) are 0.
    w1, b1 = params["linear"][0]
    w1 = w1.reshape(N_CHANNELS, SEQ_LEN, TWO_P)
    w1p = jnp.zeros((N_CHANNELS, LANE_PAD, TWO_P),
                    jnp.float32).at[:, :SEQ_LEN, :].set(w1)
    kparams["linear"].append((w1p.reshape(N_CHANNELS * LANE_PAD, TWO_P), b1))
    for (w, b) in params["linear"][1:]:
        kparams["linear"].append((w, b))
    return kparams


# --------------------------- pure-JAX reference -------------------------------
def reference_forward(x_ncl, params):
    """Straight XLA implementation of the PyTorch module, for validation."""
    h = x_ncl.astype(jnp.float32)                          # (B, C, L)
    pad = KERNEL_SIZE // 2
    for (w, b) in params["conv"]:                          # w: (C_out, C_in, K)
        xp = jnp.pad(h, ((0, 0), (0, 0), (pad, pad)))
        taps = jnp.stack([xp[:, :, k:k + SEQ_LEN]
                          for k in range(KERNEL_SIZE)], axis=-1)  # (B,Ci,L,K)
        h = jnp.tanh(jnp.einsum("bilk,oik->bol", taps, w) + b[None, :, None])
    z = h.reshape(h.shape[0], -1)                          # nn.Flatten on (B,C,L)
    n_lin = len(params["linear"])
    for li, (w, b) in enumerate(params["linear"]):
        z = z @ w + b
        if li < n_lin - 1:
            z = jnp.tanh(z)
    return z


# -------------------------------- main ---------------------------------------
if __name__ == "__main__":
    key = jax.random.PRNGKey(0)
    params, key = init_params(key)
    kparams = prepare_kernel_params(params)

    # Small case (B=2): single grid step, no batch padding, no wrapper pre-ops.
    key, kx = jax.random.split(key)
    x = jax.random.normal(kx, (BATCH, IN_CHANNELS, SEQ_LEN), jnp.float32)
    out = jax.block_until_ready(branch_forward(x, kparams))
    assert out.shape == (BATCH, TWO_P), out.shape
    assert bool(jnp.all(jnp.isfinite(out)))
    ref = reference_forward(x, params)
    max_err = float(jnp.max(jnp.abs(out - ref)))
    assert bool(jnp.allclose(out, ref, rtol=1e-3, atol=1e-3)), max_err

    # Larger case: exercises the batch-tiled "parallel" grid path (fills the
    # 8 sublanes / MXU M-dim, shards over both TensorCores on v7x).
    key, kx2 = jax.random.split(key)
    x2 = jax.random.normal(kx2, (200, IN_CHANNELS, SEQ_LEN), jnp.float32)
    out2 = jax.block_until_ready(branch_forward(x2, kparams))
    ref2 = reference_forward(x2, params)
    assert out2.shape == (200, TWO_P), out2.shape
    max_err2 = float(jnp.max(jnp.abs(out2 - ref2)))
    assert bool(jnp.allclose(out2, ref2, rtol=1e-3, atol=1e-3)), max_err2

    print("KERNEL_OK")
</pallas_src>

<mosaic_0001>
module attributes {stable_mosaic.version = 11 : i64} {
  func.func @kernel(%arg0: i32, %arg1: memref<2x3x101xf32, #tpu.memory_space<vmem>>, %arg2: memref<36xf32, #tpu.memory_space<smem>>, %arg3: memref<4xf32, #tpu.memory_space<smem>>, %arg4: memref<48xf32, #tpu.memory_space<smem>>, %arg5: memref<4xf32, #tpu.memory_space<smem>>, %arg6: memref<512x16xf32, #tpu.memory_space<vmem>>, %arg7: memref<1x16xf32, #tpu.memory_space<vmem>>, %arg8: memref<16x16xf32, #tpu.memory_space<vmem>>, %arg9: memref<1x16xf32, #tpu.memory_space<vmem>>, %arg10: memref<16x16xf32, #tpu.memory_space<vmem>>, %arg11: memref<1x16xf32, #tpu.memory_space<vmem>>, %arg12: memref<2x16xf32, #tpu.memory_space<vmem>>, %arg13: memref<3x2x128xf32, #tpu.memory_space<vmem>>) attributes {dimension_semantics = [#tpu.dimension_semantics<parallel>], iteration_bounds = array<i64: 1>, scalar_prefetch = 0 : i64, scratch_operands = 1 : i64, tpu.core_type = #tpu.core_type<tc>, window_params = [{transform_indices = @transform_0, window_bounds = array<i64: 2, 3, 101>}, {transform_indices = @transform_1, window_bounds = array<i64: 36>}, {transform_indices = @transform_2, window_bounds = array<i64: 4>}, {transform_indices = @transform_3, window_bounds = array<i64: 48>}, {transform_indices = @transform_4, window_bounds = array<i64: 4>}, {pipeline_mode = #tpu.pipeline_mode<synchronous>, transform_indices = @transform_5, window_bounds = array<i64: 512, 16>}, {pipeline_mode = #tpu.pipeline_mode<synchronous>, transform_indices = @transform_6, window_bounds = array<i64: 1, 16>}, {pipeline_mode = #tpu.pipeline_mode<synchronous>, transform_indices = @transform_7, window_bounds = array<i64: 16, 16>}, {pipeline_mode = #tpu.pipeline_mode<synchronous>, transform_indices = @transform_8, window_bounds = array<i64: 1, 16>}, {pipeline_mode = #tpu.pipeline_mode<synchronous>, transform_indices = @transform_9, window_bounds = array<i64: 16, 16>}, {pipeline_mode = #tpu.pipeline_mode<synchronous>, transform_indices = @transform_10, window_bounds = array<i64: 1, 16>}, {transform_indices = @transform_11, window_bounds = array<i64: 2, 16>}]} {
    %cst = arith.constant 0.000000e+00 : f32
    %0 = vector.broadcast %cst : f32 to vector<3x2x128xf32>
    %c0 = arith.constant 0 : index
    %c0_0 = arith.constant 0 : index
    %c0_1 = arith.constant 0 : index
    %1 = vector.load %arg13[%c0, %c0_0, %c0_1] : memref<3x2x128xf32, #tpu.memory_space<vmem>>, vector<3x2x128xf32>
    tpu.vector_store %arg13[%c0, %c0_0, %c0_1], %0 {strides = array<i32>} : memref<3x2x128xf32, #tpu.memory_space<vmem>>, vector<3x2x128xf32>,
    %c0_2 = arith.constant 0 : index
    %c0_3 = arith.constant 0 : index
    %c0_4 = arith.constant 0 : index
    %2 = vector.load %arg1[%c0_2, %c0_3, %c0_4] : memref<2x3x101xf32, #tpu.memory_space<vmem>>, vector<2x1x101xf32>
    %3 = vector.shape_cast %2 : vector<2x1x101xf32> to vector<2x101xf32>
    %c0_5 = arith.constant 0 : index
    %c0_6 = arith.constant 0 : index
    %c0_7 = arith.constant 0 : index
    %4 = vector.load %arg13[%c0_5, %c0_6, %c0_7] : memref<3x2x128xf32, #tpu.memory_space<vmem>>, vector<1x2x101xf32>
    %5 = vector.shape_cast %4 : vector<1x2x101xf32> to vector<2x101xf32>
    %6 = vector.shape_cast %3 : vector<2x101xf32> to vector<1x2x101xf32>
    tpu.vector_store %arg13[%c0_5, %c0_6, %c0_7], %6 {strides = array<i32>} : memref<3x2x128xf32, #tpu.memory_space<vmem>>, vector<1x2x101xf32>,
    %c0_8 = arith.constant 0 : index
    %c1 = arith.constant 1 : index
    %c0_9 = arith.constant 0 : index
    %7 = vector.load %arg1[%c0_8, %c1, %c0_9] : memref<2x3x101xf32, #tpu.memory_space<vmem>>, vector<2x1x101xf32>
    %8 = vector.shape_cast %7 : vector<2x1x101xf32> to vector<2x101xf32>
    %c1_10 = arith.constant 1 : index
    %c0_11 = arith.constant 0 : index
    %c0_12 = arith.constant 0 : index
    %9 = vector.load %arg13[%c1_10, %c0_11, %c0_12] : memref<3x2x128xf32, #tpu.memory_space<vmem>>, vector<1x2x101xf32>
    %10 = vector.shape_cast %9 : vector<1x2x101xf32> to vector<2x101xf32>
    %11 = vector.shape_cast %8 : vector<2x101xf32> to vector<1x2x101xf32>
    tpu.vector_store %arg13[%c1_10, %c0_11, %c0_12], %11 {strides = array<i32>} : memref<3x2x128xf32, #tpu.memory_space<vmem>>, vector<1x2x101xf32>,
    %c0_13 = arith.constant 0 : index
    %c2 = arith.constant 2 : index
    %c0_14 = arith.constant 0 : index
    %12 = vector.load %arg1[%c0_13, %c2, %c0_14] : memref<2x3x101xf32, #tpu.memory_space<vmem>>, vector<2x1x101xf32>
    %13 = vector.shape_cast %12 : vector<2x1x101xf32> to vector<2x101xf32>
    %c2_15 = arith.constant 2 : index
    %c0_16 = arith.constant 0 : index
    %c0_17 = arith.constant 0 : index
    %14 = vector.load %arg13[%c2_15, %c0_16, %c0_17] : memref<3x2x128xf32, #tpu.memory_space<vmem>>, vector<1x2x101xf32>
    %15 = vector.shape_cast %14 : vector<1x2x101xf32> to vector<2x101xf32>
    %16 = vector.shape_cast %13 : vector<2x101xf32> to vector<1x2x101xf32>
    tpu.vector_store %arg13[%c2_15, %c0_16, %c0_17], %16 {strides = array<i32>} : memref<3x2x128xf32, #tpu.memory_space<vmem>>, vector<1x2x101xf32>,
    %17 = tpu.iota {dimensions = array<i32: 1>} : vector<2x128xi32>
    %c101_i32 = arith.constant 101 : i32
    %18 = vector.broadcast %c101_i32 : i32 to vector<2x128xi32>
    %19 = arith.cmpi slt, %17, %18 : vector<2x128xi32>
    %c0_18 = arith.constant 0 : index
    %c0_19 = arith.constant 0 : index
    %c0_20 = arith.constant 0 : index
    %20 = vector.load %arg13[%c0_18, %c0_19, %c0_20] : memref<3x2x128xf32, #tpu.memory_space<vmem>>, vector<1x2x128xf32>
    %21 = vector.shape_cast %20 : vector<1x2x128xf32> to vector<2x128xf32>
    %c1_21 = arith.constant 1 : index
    %c0_22 = arith.constant 0 : index
    %c0_23 = arith.constant 0 : index
    %22 = vector.load %arg13[%c1_21, %c0_22, %c0_23] : memref<3x2x128xf32, #tpu.memory_space<vmem>>, vector<1x2x128xf32>
    %23 = vector.shape_cast %22 : vector<1x2x128xf32> to vector<2x128xf32>
    %c2_24 = arith.constant 2 : index
    %c0_25 = arith.constant 0 : index
    %c0_26 = arith.constant 0 : index
    %24 = vector.load %arg13[%c2_24, %c0_25, %c0_26] : memref<3x2x128xf32, #tpu.memory_space<vmem>>, vector<1x2x128xf32>
    %25 = vector.shape_cast %24 : vector<1x2x128xf32> to vector<2x128xf32>
    %c1_i32 = arith.constant 1 : i32
    %26 = tpu.dynamic_rotate %21 by %c1_i32 dim 1 : vector<2x128xf32>, i32 -> vector<2x128xf32>
    %c127_i32 = arith.constant 127 : i32
    %27 = tpu.dynamic_rotate %21 by %c127_i32 dim 1 : vector<2x128xf32>, i32 -> vector<2x128xf32>
    %c1_i32_27 = arith.constant 1 : i32
    %28 = tpu.dynamic_rotate %23 by %c1_i32_27 dim 1 : vector<2x128xf32>, i32 -> vector<2x128xf32>
    %c127_i32_28 = arith.constant 127 : i32
    %29 = tpu.dynamic_rotate %23 by %c127_i32_28 dim 1 : vector<2x128xf32>, i32 -> vector<2x128xf32>
    %c1_i32_29 = arith.constant 1 : i32
    %30 = tpu.dynamic_rotate %25 by %c1_i32_29 dim 1 : vector<2x128xf32>, i32 -> vector<2x128xf32>
    %c127_i32_30 = arith.constant 127 : i32
    %31 = tpu.dynamic_rotate %25 by %c127_i32_30 dim 1 : vector<2x128xf32>, i32 -> vector<2x128xf32>
    %cst_31 = arith.constant 0.000000e+00 : f32
    %32 = vector.broadcast %cst_31 : f32 to vector<2x128xf32>
    %c0_32 = arith.constant 0 : index
    %33 = memref.load %arg3[%c0_32] : memref<4xf32, #tpu.memory_space<smem>>
    %34 = vector.broadcast %33 : f32 to vector<2x128xf32>
    %35 = arith.addf %32, %34 : vector<2x128xf32>
    %c0_33 = arith.constant 0 : index
    %36 = memref.load %arg2[%c0_33] : memref<36xf32, #tpu.memory_space<smem>>
    %37 = vector.broadcast %36 : f32 to vector<2x128xf32>
    %38 = arith.mulf %37, %26 : vector<2x128xf32>
    %39 = arith.addf %35, %38 : vector<2x128xf32>
    %c1_34 = arith.constant 1 : index
    %40 = memref.load %arg2[%c1_34] : memref<36xf32, #tpu.memory_space<smem>>
    %41 = vector.broadcast %40 : f32 to vector<2x128xf32>
    %42 = arith.mulf %41, %21 : vector<2x128xf32>
    %43 = arith.addf %39, %42 : vector<2x128xf32>
    %c2_35 = arith.constant 2 : index
    %44 = memref.load %arg2[%c2_35] : memref<36xf32, #tpu.memory_space<smem>>
    %45 = vector.broadcast %44 : f32 to vector<2x128xf32>
    %46 = arith.mulf %45, %27 : vector<2x128xf32>
    %47 = arith.addf %43, %46 : vector<2x128xf32>
    %c3 = arith.constant 3 : index
    %48 = memref.load %arg2[%c3] : memref<36xf32, #tpu.memory_space<smem>>
    %49 = vector.broadcast %48 : f32 to vector<2x128xf32>
    %50 = arith.mulf %49, %28 : vector<2x128xf32>
    %51 = arith.addf %47, %50 : vector<2x128xf32>
    %c4 = arith.constant 4 : index
    %52 = memref.load %arg2[%c4] : memref<36xf32, #tpu.memory_space<smem>>
    %53 = vector.broadcast %52 : f32 to vector<2x128xf32>
    %54 = arith.mulf %53, %23 : vector<2x128xf32>
    %55 = arith.addf %51, %54 : vector<2x128xf32>
    %c5 = arith.constant 5 : index
    %56 = memref.load %arg2[%c5] : memref<36xf32, #tpu.memory_space<smem>>
    %57 = vector.broadcast %56 : f32 to vector<2x128xf32>
    %58 = arith.mulf %57, %29 : vector<2x128xf32>
    %59 = arith.addf %55, %58 : vector<2x128xf32>
    %c6 = arith.constant 6 : index
    %60 = memref.load %arg2[%c6] : memref<36xf32, #tpu.memory_space<smem>>
    %61 = vector.broadcast %60 : f32 to vector<2x128xf32>
    %62 = arith.mulf %61, %30 : vector<2x128xf32>
    %63 = arith.addf %59, %62 : vector<2x128xf32>
    %c7 = arith.constant 7 : index
    %64 = memref.load %arg2[%c7] : memref<36xf32, #tpu.memory_space<smem>>
    %65 = vector.broadcast %64 : f32 to vector<2x128xf32>
    %66 = arith.mulf %65, %25 : vector<2x128xf32>
    %67 = arith.addf %63, %66 : vector<2x128xf32>
    %c8 = arith.constant 8 : index
    %68 = memref.load %arg2[%c8] : memref<36xf32, #tpu.memory_space<smem>>
    %69 = vector.broadcast %68 : f32 to vector<2x128xf32>
    %70 = arith.mulf %69, %31 : vector<2x128xf32>
    %71 = arith.addf %67, %70 : vector<2x128xf32>
    %72 = math.tanh %71 : vector<2x128xf32>
    %cst_36 = arith.constant 0.000000e+00 : f32
    %73 = vector.broadcast %cst_36 : f32 to vector<2x128xf32>
    %74 = arith.select %19, %72, %73 : vector<2x128xi1>, vector<2x128xf32>
    %cst_37 = arith.constant 0.000000e+00 : f32
    %75 = vector.broadcast %cst_37 : f32 to vector<2x128xf32>
    %c1_38 = arith.constant 1 : index
    %76 = memref.load %arg3[%c1_38] : memref<4xf32, #tpu.memory_space<smem>>
    %77 = vector.broadcast %76 : f32 to vector<2x128xf32>
    %78 = arith.addf %75, %77 : vector<2x128xf32>
    %c9 = arith.constant 9 : index
    %79 = memref.load %arg2[%c9] : memref<36xf32, #tpu.memory_space<smem>>
    %80 = vector.broadcast %79 : f32 to vector<2x128xf32>
    %81 = arith.mulf %80, %26 : vector<2x128xf32>
    %82 = arith.addf %78, %81 : vector<2x128xf32>
    %c10 = arith.constant 10 : index
    %83 = memref.load %arg2[%c10] : memref<36xf32, #tpu.memory_space<smem>>
    %84 = vector.broadcast %83 : f32 to vector<2x128xf32>
    %85 = arith.mulf %84, %21 : vector<2x128xf32>
    %86 = arith.addf %82, %85 : vector<2x128xf32>
    %c11 = arith.constant 11 : index
    %87 = memref.load %arg2[%c11] : memref<36xf32, #tpu.memory_space<smem>>
    %88 = vector.broadcast %87 : f32 to vector<2x128xf32>
    %89 = arith.mulf %88, %27 : vector<2x128xf32>
    %90 = arith.addf %86, %89 : vector<2x128xf32>
    %c12 = arith.constant 12 : index
    %91 = memref.load %arg2[%c12] : memref<36xf32, #tpu.memory_space<smem>>
    %92 = vector.broadcast %91 : f32 to vector<2x128xf32>
    %93 = arith.mulf %92, %28 : vector<2x128xf32>
    %94 = arith.addf %90, %93 : vector<2x128xf32>
    %c13 = arith.constant 13 : index
    %95 = memref.load %arg2[%c13] : memref<36xf32, #tpu.memory_space<smem>>
    %96 = vector.broadcast %95 : f32 to vector<2x128xf32>
    %97 = arith.mulf %96, %23 : vector<2x128xf32>
    %98 = arith.addf %94, %97 : vector<2x128xf32>
    %c14 = arith.constant 14 : index
    %99 = memref.load %arg2[%c14] : memref<36xf32, #tpu.memory_space<smem>>
    %100 = vector.broadcast %99 : f32 to vector<2x128xf32>
    %101 = arith.mulf %100, %29 : vector<2x128xf32>
    %102 = arith.addf %98, %101 : vector<2x128xf32>
    %c15 = arith.constant 15 : index
    %103 = memref.load %arg2[%c15] : memref<36xf32, #tpu.memory_space<smem>>
    %104 = vector.broadcast %103 : f32 to vector<2x128xf32>
    %105 = arith.mulf %104, %30 : vector<2x128xf32>
    %106 = arith.addf %102, %105 : vector<2x128xf32>
    %c16 = arith.constant 16 : index
    %107 = memref.load %arg2[%c16] : memref<36xf32, #tpu.memory_space<smem>>
    %108 = vector.broadcast %107 : f32 to vector<2x128xf32>
    %109 = arith.mulf %108, %25 : vector<2x128xf32>
    %110 = arith.addf %106, %109 : vector<2x128xf32>
    %c17 = arith.constant 17 : index
    %111 = memref.load %arg2[%c17] : memref<36xf32, #tpu.memory_space<smem>>
    %112 = vector.broadcast %111 : f32 to vector<2x128xf32>
    %113 = arith.mulf %112, %31 : vector<2x128xf32>
    %114 = arith.addf %110, %113 : vector<2x128xf32>
    %115 = math.tanh %114 : vector<2x128xf32>
    %cst_39 = arith.constant 0.000000e+00 : f32
    %116 = vector.broadcast %cst_39 : f32 to vector<2x128xf32>
    %117 = arith.select %19, %115, %116 : vector<2x128xi1>, vector<2x128xf32>
    %cst_40 = arith.constant 0.000000e+00 : f32
    %118 = vector.broadcast %cst_40 : f32 to vector<2x128xf32>
    %c2_41 = arith.constant 2 : index
    %119 = memref.load %arg3[%c2_41] : memref<4xf32, #tpu.memory_space<smem>>
    %120 = vector.broadcast %119 : f32 to vector<2x128xf32>
    %121 = arith.addf %118, %120 : vector<2x128xf32>
    %c18 = arith.constant 18 : index
    %122 = memref.load %arg2[%c18] : memref<36xf32, #tpu.memory_space<smem>>
    %123 = vector.broadcast %122 : f32 to vector<2x128xf32>
    %124 = arith.mulf %123, %26 : vector<2x128xf32>
    %125 = arith.addf %121, %124 : vector<2x128xf32>
    %c19 = arith.constant 19 : index
    %126 = memref.load %arg2[%c19] : memref<36xf32, #tpu.memory_space<smem>>
    %127 = vector.broadcast %126 : f32 to vector<2x128xf32>
    %128 = arith.mulf %127, %21 : vector<2x128xf32>
    %129 = arith.addf %125, %128 : vector<2x128xf32>
    %c20 = arith.constant 20 : index
    %130 = memref.load %arg2[%c20] : memref<36xf32, #tpu.memory_space<smem>>
    %131 = vector.broadcast %130 : f32 to vector<2x128xf32>
    %132 = arith.mulf %131, %27 : vector<2x128xf32>
    %133 = arith.addf %129, %132 : vector<2x128xf32>
    %c21 = arith.constant 21 : index
    %134 = memref.load %arg2[%c21] : memref<36xf32, #tpu.memory_space<smem>>
    %135 = vector.broadcast %134 : f32 to vector<2x128xf32>
    %136 = arith.mulf %135, %28 : vector<2x128xf32>
    %137 = arith.addf %133, %136 : vector<2x128xf32>
    %c22 = arith.constant 22 : index
    %138 = memref.load %arg2[%c22] : memref<36xf32, #tpu.memory_space<smem>>
    %139 = vector.broadcast %138 : f32 to vector<2x128xf32>
    %140 = arith.mulf %139, %23 : vector<2x128xf32>
    %141 = arith.addf %137, %140 : vector<2x128xf32>
    %c23 = arith.constant 23 : index
    %142 = memref.load %arg2[%c23] : memref<36xf32, #tpu.memory_space<smem>>
    %143 = vector.broadcast %142 : f32 to vector<2x128xf32>
    %144 = arith.mulf %143, %29 : vector<2x128xf32>
    %145 = arith.addf %141, %144 : vector<2x128xf32>
    %c24 = arith.constant 24 : index
    %146 = memref.load %arg2[%c24] : memref<36xf32, #tpu.memory_space<smem>>
    %147 = vector.broadcast %146 : f32 to vector<2x128xf32>
    %148 = arith.mulf %147, %30 : vector<2x128xf32>
    %149 = arith.addf %145, %148 : vector<2x128xf32>
    %c25 = arith.constant 25 : index
    %150 = memref.load %arg2[%c25] : memref<36xf32, #tpu.memory_space<smem>>
    %151 = vector.broadcast %150 : f32 to vector<2x128xf32>
    %152 = arith.mulf %151, %25 : vector<2x128xf32>
    %153 = arith.addf %149, %152 : vector<2x128xf32>
    %c26 = arith.constant 26 : index
    %154 = memref.load %arg2[%c26] : memref<36xf32, #tpu.memory_space<smem>>
    %155 = vector.broadcast %154 : f32 to vector<2x128xf32>
    %156 = arith.mulf %155, %31 : vector<2x128xf32>
    %157 = arith.addf %153, %156 : vector<2x128xf32>
    %158 = math.tanh %157 : vector<2x128xf32>
    %cst_42 = arith.constant 0.000000e+00 : f32
    %159 = vector.broadcast %cst_42 : f32 to vector<2x128xf32>
    %160 = arith.select %19, %158, %159 : vector<2x128xi1>, vector<2x128xf32>
    %cst_43 = arith.constant 0.000000e+00 : f32
    %161 = vector.broadcast %cst_43 : f32 to vector<2x128xf32>
    %c3_44 = arith.constant 3 : index
    %162 = memref.load %arg3[%c3_44] : memref<4xf32, #tpu.memory_space<smem>>
    %163 = vector.broadcast %162 : f32 to vector<2x128xf32>
    %164 = arith.addf %161, %163 : vector<2x128xf32>
    %c27 = arith.constant 27 : index
    %165 = memref.load %arg2[%c27] : memref<36xf32, #tpu.memory_space<smem>>
    %166 = vector.broadcast %165 : f32 to vector<2x128xf32>
    %167 = arith.mulf %166, %26 : vector<2x128xf32>
    %168 = arith.addf %164, %167 : vector<2x128xf32>
    %c28 = arith.constant 28 : index
    %169 = memref.load %arg2[%c28] : memref<36xf32, #tpu.memory_space<smem>>
    %170 = vector.broadcast %169 : f32 to vector<2x128xf32>
    %171 = arith.mulf %170, %21 : vector<2x128xf32>
    %172 = arith.addf %168, %171 : vector<2x128xf32>
    %c29 = arith.constant 29 : index
    %173 = memref.load %arg2[%c29] : memref<36xf32, #tpu.memory_space<smem>>
    %174 = vector.broadcast %173 : f32 to vector<2x128xf32>
    %175 = arith.mulf %174, %27 : vector<2x128xf32>
    %176 = arith.addf %172, %175 : vector<2x128xf32>
    %c30 = arith.constant 30 : index
    %177 = memref.load %arg2[%c30] : memref<36xf32, #tpu.memory_space<smem>>
    %178 = vector.broadcast %177 : f32 to vector<2x128xf32>
    %179 = arith.mulf %178, %28 : vector<2x128xf32>
    %180 = arith.addf %176, %179 : vector<2x128xf32>
    %c31 = arith.constant 31 : index
    %181 = memref.load %arg2[%c31] : memref<36xf32, #tpu.memory_space<smem>>
    %182 = vector.broadcast %181 : f32 to vector<2x128xf32>
    %183 = arith.mulf %182, %23 : vector<2x128xf32>
    %184 = arith.addf %180, %183 : vector<2x128xf32>
    %c32 = arith.constant 32 : index
    %185 = memref.load %arg2[%c32] : memref<36xf32, #tpu.memory_space<smem>>
    %186 = vector.broadcast %185 : f32 to vector<2x128xf32>
    %187 = arith.mulf %186, %29 : vector<2x128xf32>
    %188 = arith.addf %184, %187 : vector<2x128xf32>
    %c33 = arith.constant 33 : index
    %189 = memref.load %arg2[%c33] : memref<36xf32, #tpu.memory_space<smem>>
    %190 = vector.broadcast %189 : f32 to vector<2x128xf32>
    %191 = arith.mulf %190, %30 : vector<2x128xf32>
    %192 = arith.addf %188, %191 : vector<2x128xf32>
    %c34 = arith.constant 34 : index
    %193 = memref.load %arg2[%c34] : memref<36xf32, #tpu.memory_space<smem>>
    %194 = vector.broadcast %193 : f32 to vector<2x128xf32>
    %195 = arith.mulf %194, %25 : vector<2x128xf32>
    %196 = arith.addf %192, %195 : vector<2x128xf32>
    %c35 = arith.constant 35 : index
    %197 = memref.load %arg2[%c35] : memref<36xf32, #tpu.memory_space<smem>>
    %198 = vector.broadcast %197 : f32 to vector<2x128xf32>
    %199 = arith.mulf %198, %31 : vector<2x128xf32>
    %200 = arith.addf %196, %199 : vector<2x128xf32>
    %201 = math.tanh %200 : vector<2x128xf32>
    %cst_45 = arith.constant 0.000000e+00 : f32
    %202 = vector.broadcast %cst_45 : f32 to vector<2x128xf32>
    %203 = arith.select %19, %201, %202 : vector<2x128xi1>, vector<2x128xf32>
    %c1_i32_46 = arith.constant 1 : i32
    %204 = tpu.dynamic_rotate %74 by %c1_i32_46 dim 1 : vector<2x128xf32>, i32 -> vector<2x128xf32>
    %c127_i32_47 = arith.constant 127 : i32
    %205 = tpu.dynamic_rotate %74 by %c127_i32_47 dim 1 : vector<2x128xf32>, i32 -> vector<2x128xf32>
    %c1_i32_48 = arith.constant 1 : i32
    %206 = tpu.dynamic_rotate %117 by %c1_i32_48 dim 1 : vector<2x128xf32>, i32 -> vector<2x128xf32>
    %c127_i32_49 = arith.constant 127 : i32
    %207 = tpu.dynamic_rotate %117 by %c127_i32_49 dim 1 : vector<2x128xf32>, i32 -> vector<2x128xf32>
    %c1_i32_50 = arith.constant 1 : i32
    %208 = tpu.dynamic_rotate %160 by %c1_i32_50 dim 1 : vector<2x128xf32>, i32 -> vector<2x128xf32>
    %c127_i32_51 = arith.constant 127 : i32
    %209 = tpu.dynamic_rotate %160 by %c127_i32_51 dim 1 : vector<2x128xf32>, i32 -> vector<2x128xf32>
    %c1_i32_52 = arith.constant 1 : i32
    %210 = tpu.dynamic_rotate %203 by %c1_i32_52 dim 1 : vector<2x128xf32>, i32 -> vector<2x128xf32>
    %c127_i32_53 = arith.constant 127 : i32
    %211 = tpu.dynamic_rotate %203 by %c127_i32_53 dim 1 : vector<2x128xf32>, i32 -> vector<2x128xf32>
    %cst_54 = arith.constant 0.000000e+00 : f32
    %212 = vector.broadcast %cst_54 : f32 to vector<2x128xf32>
    %c0_55 = arith.constant 0 : index
    %213 = memref.load %arg5[%c0_55] : memref<4xf32, #tpu.memory_space<smem>>
    %214 = vector.broadcast %213 : f32 to vector<2x128xf32>
    %215 = arith.addf %212, %214 : vector<2x128xf32>
    %c0_56 = arith.constant 0 : index
    %216 = memref.load %arg4[%c0_56] : memref<48xf32, #tpu.memory_space<smem>>
    %217 = vector.broadcast %216 : f32 to vector<2x128xf32>
    %218 = arith.mulf %217, %204 : vector<2x128xf32>
    %219 = arith.addf %215, %218 : vector<2x128xf32>
    %c1_57 = arith.constant 1 : index
    %220 = memref.load %arg4[%c1_57] : memref<48xf32, #tpu.memory_space<smem>>
    %221 = vector.broadcast %220 : f32 to vector<2x128xf32>
    %222 = arith.mulf %221, %74 : vector<2x128xf32>
    %223 = arith.addf %219, %222 : vector<2x128xf32>
    %c2_58 = arith.constant 2 : index
    %224 = memref.load %arg4[%c2_58] : memref<48xf32, #tpu.memory_space<smem>>
    %225 = vector.broadcast %224 : f32 to vector<2x128xf32>
    %226 = arith.mulf %225, %205 : vector<2x128xf32>
    %227 = arith.addf %223, %226 : vector<2x128xf32>
    %c3_59 = arith.constant 3 : index
    %228 = memref.load %arg4[%c3_59] : memref<48xf32, #tpu.memory_space<smem>>
    %229 = vector.broadcast %228 : f32 to vector<2x128xf32>
    %230 = arith.mulf %229, %206 : vector<2x128xf32>
    %231 = arith.addf %227, %230 : vector<2x128xf32>
    %c4_60 = arith.constant 4 : index
    %232 = memref.load %arg4[%c4_60] : memref<48xf32, #tpu.memory_space<smem>>
    %233 = vector.broadcast %232 : f32 to vector<2x128xf32>
    %234 = arith.mulf %233, %117 : vector<2x128xf32>
    %235 = arith.addf %231, %234 : vector<2x128xf32>
    %c5_61 = arith.constant 5 : index
    %236 = memref.load %arg4[%c5_61] : memref<48xf32, #tpu.memory_space<smem>>
    %237 = vector.broadcast %236 : f32 to vector<2x128xf32>
    %238 = arith.mulf %237, %207 : vector<2x128xf32>
    %239 = arith.addf %235, %238 : vector<2x128xf32>
    %c6_62 = arith.constant 6 : index
    %240 = memref.load %arg4[%c6_62] : memref<48xf32, #tpu.memory_space<smem>>
    %241 = vector.broadcast %240 : f32 to vector<2x128xf32>
    %242 = arith.mulf %241, %208 : vector<2x128xf32>
    %243 = arith.addf %239, %242 : vector<2x128xf32>
    %c7_63 = arith.constant 7 : index
    %244 = memref.load %arg4[%c7_63] : memref<48xf32, #tpu.memory_space<smem>>
    %245 = vector.broadcast %244 : f32 to vector<2x128xf32>
    %246 = arith.mulf %245, %160 : vector<2x128xf32>
    %247 = arith.addf %243, %246 : vector<2x128xf32>
    %c8_64 = arith.constant 8 : index
    %248 = memref.load %arg4[%c8_64] : memref<48xf32, #tpu.memory_space<smem>>
    %249 = vector.broadcast %248 : f32 to vector<2x128xf32>
    %250 = arith.mulf %249, %209 : vector<2x128xf32>
    %251 = arith.addf %247, %250 : vector<2x128xf32>
    %c9_65 = arith.constant 9 : index
    %252 = memref.load %arg4[%c9_65] : memref<48xf32, #tpu.memory_space<smem>>
    %253 = vector.broadcast %252 : f32 to vector<2x128xf32>
    %254 = arith.mulf %253, %210 : vector<2x128xf32>
    %255 = arith.addf %251, %254 : vector<2x128xf32>
    %c10_66 = arith.constant 10 : index
    %256 = memref.load %arg4[%c10_66] : memref<48xf32, #tpu.memory_space<smem>>
    %257 = vector.broadcast %256 : f32 to vector<2x128xf32>
    %258 = arith.mulf %257, %203 : vector<2x128xf32>
    %259 = arith.addf %255, %258 : vector<2x128xf32>
    %c11_67 = arith.constant 11 : index
    %260 = memref.load %arg4[%c11_67] : memref<48xf32, #tpu.memory_space<smem>>
    %261 = vector.broadcast %260 : f32 to vector<2x128xf32>
    %262 = arith.mulf %261, %211 : vector<2x128xf32>
    %263 = arith.addf %259, %262 : vector<2x128xf32>
    %264 = math.tanh %263 : vector<2x128xf32>
    %cst_68 = arith.constant 0.000000e+00 : f32
    %265 = vector.broadcast %cst_68 : f32 to vector<2x128xf32>
    %c1_69 = arith.constant 1 : index
    %266 = memref.load %arg5[%c1_69] : memref<4xf32, #tpu.memory_space<smem>>
    %267 = vector.broadcast %266 : f32 to vector<2x128xf32>
    %268 = arith.addf %265, %267 : vector<2x128xf32>
    %c12_70 = arith.constant 12 : index
    %269 = memref.load %arg4[%c12_70] : memref<48xf32, #tpu.memory_space<smem>>
    %270 = vector.broadcast %269 : f32 to vector<2x128xf32>
    %271 = arith.mulf %270, %204 : vector<2x128xf32>
    %272 = arith.addf %268, %271 : vector<2x128xf32>
    %c13_71 = arith.constant 13 : index
    %273 = memref.load %arg4[%c13_71] : memref<48xf32, #tpu.memory_space<smem>>
    %274 = vector.broadcast %273 : f32 to vector<2x128xf32>
    %275 = arith.mulf %274, %74 : vector<2x128xf32>
    %276 = arith.addf %272, %275 : vector<2x128xf32>
    %c14_72 = arith.constant 14 : index
    %277 = memref.load %arg4[%c14_72] : memref<48xf32, #tpu.memory_space<smem>>
    %278 = vector.broadcast %277 : f32 to vector<2x128xf32>
    %279 = arith.mulf %278, %205 : vector<2x128xf32>
    %280 = arith.addf %276, %279 : vector<2x128xf32>
    %c15_73 = arith.constant 15 : index
    %281 = memref.load %arg4[%c15_73] : memref<48xf32, #tpu.memory_space<smem>>
    %282 = vector.broadcast %281 : f32 to vector<2x128xf32>
    %283 = arith.mulf %282, %206 : vector<2x128xf32>
    %284 = arith.addf %280, %283 : vector<2x128xf32>
    %c16_74 = arith.constant 16 : index
    %285 = memref.load %arg4[%c16_74] : memref<48xf32, #tpu.memory_space<smem>>
    %286 = vector.broadcast %285 : f32 to vector<2x128xf32>
    %287 = arith.mulf %286, %117 : vector<2x128xf32>
    %288 = arith.addf %284, %287 : vector<2x128xf32>
    %c17_75 = arith.constant 17 : index
    %289 = memref.load %arg4[%c17_75] : memref<48xf32, #tpu.memory_space<smem>>
    %290 = vector.broadcast %289 : f32 to vector<2x128xf32>
    %291 = arith.mulf %290, %207 : vector<2x128xf32>
    %292 = arith.addf %288, %291 : vector<2x128xf32>
    %c18_76 = arith.constant 18 : index
    %293 = memref.load %arg4[%c18_76] : memref<48xf32, #tpu.memory_space<smem>>
    %294 = vector.broadcast %293 : f32 to vector<2x128xf32>
    %295 = arith.mulf %294, %208 : vector<2x128xf32>
    %296 = arith.addf %292, %295 : vector<2x128xf32>
    %c19_77 = arith.constant 19 : index
    %297 = memref.load %arg4[%c19_77] : memref<48xf32, #tpu.memory_space<smem>>
    %298 = vector.broadcast %297 : f32 to vector<2x128xf32>
    %299 = arith.mulf %298, %160 : vector<2x128xf32>
    %300 = arith.addf %296, %299 : vector<2x128xf32>
    %c20_78 = arith.constant 20 : index
    %301 = memref.load %arg4[%c20_78] : memref<48xf32, #tpu.memory_space<smem>>
    %302 = vector.broadcast %301 : f32 to vector<2x128xf32>
    %303 = arith.mulf %302, %209 : vector<2x128xf32>
    %304 = arith.addf %300, %303 : vector<2x128xf32>
    %c21_79 = arith.constant 21 : index
    %305 = memref.load %arg4[%c21_79] : memref<48xf32, #tpu.memory_space<smem>>
    %306 = vector.broadcast %305 : f32 to vector<2x128xf32>
    %307 = arith.mulf %306, %210 : vector<2x128xf32>
    %308 = arith.addf %304, %307 : vector<2x128xf32>
    %c22_80 = arith.constant 22 : index
    %309 = memref.load %arg4[%c22_80] : memref<48xf32, #tpu.memory_space<smem>>
    %310 = vector.broadcast %309 : f32 to vector<2x128xf32>
    %311 = arith.mulf %310, %203 : vector<2x128xf32>
    %312 = arith.addf %308, %311 : vector<2x128xf32>
    %c23_81 = arith.constant 23 : index
    %313 = memref.load %arg4[%c23_81] : memref<48xf32, #tpu.memory_space<smem>>
    %314 = vector.broadcast %313 : f32 to vector<2x128xf32>
    %315 = arith.mulf %314, %211 : vector<2x128xf32>
    %316 = arith.addf %312, %315 : vector<2x128xf32>
    %317 = math.tanh %316 : vector<2x128xf32>
    %cst_82 = arith.constant 0.000000e+00 : f32
    %318 = vector.broadcast %cst_82 : f32 to vector<2x128xf32>
    %c2_83 = arith.constant 2 : index
    %319 = memref.load %arg5[%c2_83] : memref<4xf32, #tpu.memory_space<smem>>
    %320 = vector.broadcast %319 : f32 to vector<2x128xf32>
    %321 = arith.addf %318, %320 : vector<2x128xf32>
    %c24_84 = arith.constant 24 : index
    %322 = memref.load %arg4[%c24_84] : memref<48xf32, #tpu.memory_space<smem>>
    %323 = vector.broadcast %322 : f32 to vector<2x128xf32>
    %324 = arith.mulf %323, %204 : vector<2x128xf32>
    %325 = arith.addf %321, %324 : vector<2x128xf32>
    %c25_85 = arith.constant 25 : index
    %326 = memref.load %arg4[%c25_85] : memref<48xf32, #tpu.memory_space<smem>>
    %327 = vector.broadcast %326 : f32 to vector<2x128xf32>
    %328 = arith.mulf %327, %74 : vector<2x128xf32>
    %329 = arith.addf %325, %328 : vector<2x128xf32>
    %c26_86 = arith.constant 26 : index
    %330 = memref.load %arg4[%c26_86] : memref<48xf32, #tpu.memory_space<smem>>
    %331 = vector.broadcast %330 : f32 to vector<2x128xf32>
    %332 = arith.mulf %331, %205 : vector<2x128xf32>
    %333 = arith.addf %329, %332 : vector<2x128xf32>
    %c27_87 = arith.constant 27 : index
    %334 = memref.load %arg4[%c27_87] : memref<48xf32, #tpu.memory_space<smem>>
    %335 = vector.broadcast %334 : f32 to vector<2x128xf32>
    %336 = arith.mulf %335, %206 : vector<2x128xf32>
    %337 = arith.addf %333, %336 : vector<2x128xf32>
    %c28_88 = arith.constant 28 : index
    %338 = memref.load %arg4[%c28_88] : memref<48xf32, #tpu.memory_space<smem>>
    %339 = vector.broadcast %338 : f32 to vector<2x128xf32>
    %340 = arith.mulf %339, %117 : vector<2x128xf32>
    %341 = arith.addf %337, %340 : vector<2x128xf32>
    %c29_89 = arith.constant 29 : index
    %342 = memref.load %arg4[%c29_89] : memref<48xf32, #tpu.memory_space<smem>>
    %343 = vector.broadcast %342 : f32 to vector<2x128xf32>
    %344 = arith.mulf %343, %207 : vector<2x128xf32>
    %345 = arith.addf %341, %344 : vector<2x128xf32>
    %c30_90 = arith.constant 30 : index
    %346 = memref.load %arg4[%c30_90] : memref<48xf32, #tpu.memory_space<smem>>
    %347 = vector.broadcast %346 : f32 to vector<2x128xf32>
    %348 = arith.mulf %347, %208 : vector<2x128xf32>
    %349 = arith.addf %345, %348 : vector<2x128xf32>
    %c31_91 = arith.constant 31 : index
    %350 = memref.load %arg4[%c31_91] : memref<48xf32, #tpu.memory_space<smem>>
    %351 = vector.broadcast %350 : f32 to vector<2x128xf32>
    %352 = arith.mulf %351, %160 : vector<2x128xf32>
    %353 = arith.addf %349, %352 : vector<2x128xf32>
    %c32_92 = arith.constant 32 : index
    %354 = memref.load %arg4[%c32_92] : memref<48xf32, #tpu.memory_space<smem>>
    %355 = vector.broadcast %354 : f32 to vector<2x128xf32>
    %356 = arith.mulf %355, %209 : vector<2x128xf32>
    %357 = arith.addf %353, %356 : vector<2x128xf32>
    %c33_93 = arith.constant 33 : index
    %358 = memref.load %arg4[%c33_93] : memref<48xf32, #tpu.memory_space<smem>>
    %359 = vector.broadcast %358 : f32 to vector<2x128xf32>
    %360 = arith.mulf %359, %210 : vector<2x128xf32>
    %361 = arith.addf %357, %360 : vector<2x128xf32>
    %c34_94 = arith.constant 34 : index
    %362 = memref.load %arg4[%c34_94] : memref<48xf32, #tpu.memory_space<smem>>
    %363 = vector.broadcast %362 : f32 to vector<2x128xf32>
    %364 = arith.mulf %363, %203 : vector<2x128xf32>
    %365 = arith.addf %361, %364 : vector<2x128xf32>
    %c35_95 = arith.constant 35 : index
    %366 = memref.load %arg4[%c35_95] : memref<48xf32, #tpu.memory_space<smem>>
    %367 = vector.broadcast %366 : f32 to vector<2x128xf32>
    %368 = arith.mulf %367, %211 : vector<2x128xf32>
    %369 = arith.addf %365, %368 : vector<2x128xf32>
    %370 = math.tanh %369 : vector<2x128xf32>
    %cst_96 = arith.constant 0.000000e+00 : f32
    %371 = vector.broadcast %cst_96 : f32 to vector<2x128xf32>
    %c3_97 = arith.constant 3 : index
    %372 = memref.load %arg5[%c3_97] : memref<4xf32, #tpu.memory_space<smem>>
    %373 = vector.broadcast %372 : f32 to vector<2x128xf32>
    %374 = arith.addf %371, %373 : vector<2x128xf32>
    %c36 = arith.constant 36 : index
    %375 = memref.load %arg4[%c36] : memref<48xf32, #tpu.memory_space<smem>>
    %376 = vector.broadcast %375 : f32 to vector<2x128xf32>
    %377 = arith.mulf %376, %204 : vector<2x128xf32>
    %378 = arith.addf %374, %377 : vector<2x128xf32>
    %c37 = arith.constant 37 : index
    %379 = memref.load %arg4[%c37] : memref<48xf32, #tpu.memory_space<smem>>
    %380 = vector.broadcast %379 : f32 to vector<2x128xf32>
    %381 = arith.mulf %380, %74 : vector<2x128xf32>
    %382 = arith.addf %378, %381 : vector<2x128xf32>
    %c38 = arith.constant 38 : index
    %383 = memref.load %arg4[%c38] : memref<48xf32, #tpu.memory_space<smem>>
    %384 = vector.broadcast %383 : f32 to vector<2x128xf32>
    %385 = arith.mulf %384, %205 : vector<2x128xf32>
    %386 = arith.addf %382, %385 : vector<2x128xf32>
    %c39 = arith.constant 39 : index
    %387 = memref.load %arg4[%c39] : memref<48xf32, #tpu.memory_space<smem>>
    %388 = vector.broadcast %387 : f32 to vector<2x128xf32>
    %389 = arith.mulf %388, %206 : vector<2x128xf32>
    %390 = arith.addf %386, %389 : vector<2x128xf32>
    %c40 = arith.constant 40 : index
    %391 = memref.load %arg4[%c40] : memref<48xf32, #tpu.memory_space<smem>>
    %392 = vector.broadcast %391 : f32 to vector<2x128xf32>
    %393 = arith.mulf %392, %117 : vector<2x128xf32>
    %394 = arith.addf %390, %393 : vector<2x128xf32>
    %c41 = arith.constant 41 : index
    %395 = memref.load %arg4[%c41] : memref<48xf32, #tpu.memory_space<smem>>
    %396 = vector.broadcast %395 : f32 to vector<2x128xf32>
    %397 = arith.mulf %396, %207 : vector<2x128xf32>
    %398 = arith.addf %394, %397 : vector<2x128xf32>
    %c42 = arith.constant 42 : index
    %399 = memref.load %arg4[%c42] : memref<48xf32, #tpu.memory_space<smem>>
    %400 = vector.broadcast %399 : f32 to vector<2x128xf32>
    %401 = arith.mulf %400, %208 : vector<2x128xf32>
    %402 = arith.addf %398, %401 : vector<2x128xf32>
    %c43 = arith.constant 43 : index
    %403 = memref.load %arg4[%c43] : memref<48xf32, #tpu.memory_space<smem>>
    %404 = vector.broadcast %403 : f32 to vector<2x128xf32>
    %405 = arith.mulf %404, %160 : vector<2x128xf32>
    %406 = arith.addf %402, %405 : vector<2x128xf32>
    %c44 = arith.constant 44 : index
    %407 = memref.load %arg4[%c44] : memref<48xf32, #tpu.memory_space<smem>>
    %408 = vector.broadcast %407 : f32 to vector<2x128xf32>
    %409 = arith.mulf %408, %209 : vector<2x128xf32>
    %410 = arith.addf %406, %409 : vector<2x128xf32>
    %c45 = arith.constant 45 : index
    %411 = memref.load %arg4[%c45] : memref<48xf32, #tpu.memory_space<smem>>
    %412 = vector.broadcast %411 : f32 to vector<2x128xf32>
    %413 = arith.mulf %412, %210 : vector<2x128xf32>
    %414 = arith.addf %410, %413 : vector<2x128xf32>
    %c46 = arith.constant 46 : index
    %415 = memref.load %arg4[%c46] : memref<48xf32, #tpu.memory_space<smem>>
    %416 = vector.broadcast %415 : f32 to vector<2x128xf32>
    %417 = arith.mulf %416, %203 : vector<2x128xf32>
    %418 = arith.addf %414, %417 : vector<2x128xf32>
    %c47 = arith.constant 47 : index
    %419 = memref.load %arg4[%c47] : memref<48xf32, #tpu.memory_space<smem>>
    %420 = vector.broadcast %419 : f32 to vector<2x128xf32>
    %421 = arith.mulf %420, %211 : vector<2x128xf32>
    %422 = arith.addf %418, %421 : vector<2x128xf32>
    %423 = math.tanh %422 : vector<2x128xf32>
    %424 = tpu.concatenate %264, %317, %370, %423 in 1 : vector<2x128xf32>, vector<2x128xf32>, vector<2x128xf32>, vector<2x128xf32> -> vector<2x512xf32>
    %c0_98 = arith.constant 0 : index
    %c0_99 = arith.constant 0 : index
    %425 = vector.load %arg6[%c0_98, %c0_99] : memref<512x16xf32, #tpu.memory_space<vmem>>, vector<512x16xf32>
    %cst_100 = arith.constant dense<0.000000e+00> : vector<2x16xf32>
    %426 = tpu.matmul %424, %425, %cst_100 {dimension_numbers = #tpu.dot_dimension_numbers<[1], [0], [0], [1], [0, 0, 1, 1], [], []>} : vector<2x512xf32>, vector<512x16xf32>, vector<2x16xf32> -> vector<2x16xf32>
    %c0_101 = arith.constant 0 : index
    %c0_102 = arith.constant 0 : index
    %427 = vector.load %arg7[%c0_101, %c0_102] : memref<1x16xf32, #tpu.memory_space<vmem>>, vector<1x16xf32>
    %428 = vector.broadcast %427 : vector<1x16xf32> to vector<2x16xf32>
    %429 = arith.addf %426, %428 : vector<2x16xf32>
    %430 = math.tanh %429 : vector<2x16xf32>
    %c0_103 = arith.constant 0 : index
    %c0_104 = arith.constant 0 : index
    %431 = vector.load %arg8[%c0_103, %c0_104] : memref<16x16xf32, #tpu.memory_space<vmem>>, vector<16x16xf32>
    %cst_105 = arith.constant dense<0.000000e+00> : vector<2x16xf32>
    %432 = tpu.matmul %430, %431, %cst_105 {dimension_numbers = #tpu.dot_dimension_numbers<[1], [0], [0], [1], [0, 0, 1, 1], [], []>} : vector<2x16xf32>, vector<16x16xf32>, vector<2x16xf32> -> vector<2x16xf32>
    %c0_106 = arith.constant 0 : index
    %c0_107 = arith.constant 0 : index
    %433 = vector.load %arg9[%c0_106, %c0_107] : memref<1x16xf32, #tpu.memory_space<vmem>>, vector<1x16xf32>
    %434 = vector.broadcast %433 : vector<1x16xf32> to vector<2x16xf32>
    %435 = arith.addf %432, %434 : vector<2x16xf32>
    %436 = math.tanh %435 : vector<2x16xf32>
    %c0_108 = arith.constant 0 : index
    %c0_109 = arith.constant 0 : index
    %437 = vector.load %arg10[%c0_108, %c0_109] : memref<16x16xf32, #tpu.memory_space<vmem>>, vector<16x16xf32>
    %cst_110 = arith.constant dense<0.000000e+00> : vector<2x16xf32>
    %438 = tpu.matmul %436, %437, %cst_110 {dimension_numbers = #tpu.dot_dimension_numbers<[1], [0], [0], [1], [0, 0, 1, 1], [], []>} : vector<2x16xf32>, vector<16x16xf32>, vector<2x16xf32> -> vector<2x16xf32>
    %c0_111 = arith.constant 0 : index
    %c0_112 = arith.constant 0 : index
    %439 = vector.load %arg11[%c0_111, %c0_112] : memref<1x16xf32, #tpu.memory_space<vmem>>, vector<1x16xf32>
    %440 = vector.broadcast %439 : vector<1x16xf32> to vector<2x16xf32>
    %441 = arith.addf %438, %440 : vector<2x16xf32>
    %c0_113 = arith.constant 0 : index
    %c0_114 = arith.constant 0 : index
    %442 = vector.load %arg12[%c0_113, %c0_114] : memref<2x16xf32, #tpu.memory_space<vmem>>, vector<2x16xf32>
    tpu.vector_store %arg12[%c0_113, %c0_114], %441 {strides = array<i32>} : memref<2x16xf32, #tpu.memory_space<vmem>>, vector<2x16xf32>,
    return
  }
  func.func @transform_0(%arg0: i32) -> (i32, i32, i32) {
    %c0_i32 = arith.constant 0 : i32
    %c0_i32_0 = arith.constant 0 : i32
    %c0_i32_1 = arith.constant 0 : i32
    return %arg0, %c0_i32, %c0_i32_0 : i32, i32, i32
  }
  func.func @transform_1(%arg0: i32) -> i32 {
    %c0_i32 = arith.constant 0 : i32
    %c0_i32_0 = arith.constant 0 : i32
    return %c0_i32 : i32
  }
  func.func @transform_2(%arg0: i32) -> i32 {
    %c0_i32 = arith.constant 0 : i32
    %c0_i32_0 = arith.constant 0 : i32
    return %c0_i32 : i32
  }
  func.func @transform_3(%arg0: i32) -> i32 {
    %c0_i32 = arith.constant 0 : i32
    %c0_i32_0 = arith.constant 0 : i32
    return %c0_i32 : i32
  }
  func.func @transform_4(%arg0: i32) -> i32 {
    %c0_i32 = arith.constant 0 : i32
    %c0_i32_0 = arith.constant 0 : i32
    return %c0_i32 : i32
  }
  func.func @transform_5(%arg0: i32) -> (i32, i32) {
    %c0_i32 = arith.constant 0 : i32
    %c0_i32_0 = arith.constant 0 : i32
    %c0_i32_1 = arith.constant 0 : i32
    return %c0_i32, %c0_i32_0 : i32, i32
  }
  func.func @transform_6(%arg0: i32) -> (i32, i32) {
    %c0_i32 = arith.constant 0 : i32
    %c0_i32_0 = arith.constant 0 : i32
    %c0_i32_1 = arith.constant 0 : i32
    return %c0_i32, %c0_i32_0 : i32, i32
  }
  func.func @transform_7(%arg0: i32) -> (i32, i32) {
    %c0_i32 = arith.constant 0 : i32
    %c0_i32_0 = arith.constant 0 : i32
    %c0_i32_1 = arith.constant 0 : i32
    return %c0_i32, %c0_i32_0 : i32, i32
  }
  func.func @transform_8(%arg0: i32) -> (i32, i32) {
    %c0_i32 = arith.constant 0 : i32
    %c0_i32_0 = arith.constant 0 : i32
    %c0_i32_1 = arith.constant 0 : i32
    return %c0_i32, %c0_i32_0 : i32, i32
  }
  func.func @transform_9(%arg0: i32) -> (i32, i32) {
    %c0_i32 = arith.constant 0 : i32
    %c0_i32_0 = arith.constant 0 : i32
    %c0_i32_1 = arith.constant 0 : i32
    return %c0_i32, %c0_i32_0 : i32, i32
  }
  func.func @transform_10(%arg0: i32) -> (i32, i32) {
    %c0_i32 = arith.constant 0 : i32
    %c0_i32_0 = arith.constant 0 : i32
    %c0_i32_1 = arith.constant 0 : i32
    return %c0_i32, %c0_i32_0 : i32, i32
  }
  func.func @transform_11(%arg0: i32) -> (i32, i32) {
    %c0_i32 = arith.constant 0 : i32
    %c0_i32_0 = arith.constant 0 : i32
    return %arg0, %c0_i32 : i32, i32
  }
}

</mosaic_0001>

<llo_original>
// kernel: branch_forward.1
$region0: #{branch_forward.1}
  #allocation0 [shape = 'u32[]', space=smem, size = 0x4, offset = 0x4, fixed_abs, tag = 'smem constant byte address 0x4 - core index']
  #allocation1 [shape = 'u32[144,128]{1,0:T(1,128)}', space=vmem, size = 0x12000, scoped, tag = 'internal scratch']
  #allocation2 [shape = 'f32[3,2,128]{2,1,0:T(2,128)}', space=vmem, size = 0xc00, scoped, tag = 'scratch operand']
  %s0 = inlined_call_operand.vmem [shape: f32[2,3,101], index: 0, kind: input, shape index: {}]
  %s1 = inlined_call_operand.vmem [shape: f32[36], index: 1, kind: input, shape index: {}]
  %s2 = inlined_call_operand.vmem [shape: f32[4], index: 2, kind: input, shape index: {}]
  %s3 = inlined_call_operand.vmem [shape: f32[48], index: 3, kind: input, shape index: {}]
  %s4 = inlined_call_operand.vmem [shape: f32[4], index: 4, kind: input, shape index: {}]
  %s5 = inlined_call_operand.vmem [shape: f32[512,16], index: 5, kind: input, shape index: {}]
  %s6 = inlined_call_operand.vmem [shape: f32[1,16], index: 6, kind: input, shape index: {}]
  %s7 = inlined_call_operand.vmem [shape: f32[16,16], index: 7, kind: input, shape index: {}]
  %s8 = inlined_call_operand.vmem [shape: f32[1,16], index: 8, kind: input, shape index: {}]
  %s9 = inlined_call_operand.vmem [shape: f32[16,16], index: 9, kind: input, shape index: {}]
  %s10 = inlined_call_operand.vmem [shape: f32[1,16], index: 10, kind: input, shape index: {}]
  %s11 = inlined_call_operand.hbm [shape: f32[2,16], index: 11, kind: output, shape index: {}]
  %s12 = sld [smem:[#allocation0]]
  $region70: #{branch_forward.1} parent=0
    _
  %s14 = ssub.s32 1, %s12
  %s15 = scalar_select 0, %s14, %s12
  $region1: #{branch_forward.1} parent=0
    #allocation3 [shape = 'u8[512]{0}', space=smem, size = 0x200, scoped, tag = 'input window, operand 1, single buffered']
    #allocation4 [shape = 's32[1]{0}', space=sflag, size = 0x4, scoped, tag = 'scoped memory for branch_forward.1']
    #allocation5 [shape = 's32[1]{0}', space=sflag, size = 0x4, scoped, tag = 'scoped memory for branch_forward.1']
    #allocation6 [shape = 'u8[512]{0}', space=smem, size = 0x200, scoped, tag = 'input window, operand 2, single buffered']
    #allocation7 [shape = 's32[1]{0}', space=sflag, size = 0x4, scoped, tag = 'scoped memory for branch_forward.1']
    #allocation8 [shape = 'u8[512]{0}', space=smem, size = 0x200, scoped, tag = 'input window, operand 3, single buffered']
    #allocation9 [shape = 'u8[512]{0}', space=smem, size = 0x200, scoped, tag = 'input window, operand 4, single buffered']
    #allocation10 [shape = 's32[1]{0}', space=sflag, size = 0x4, scoped, tag = 'scoped memory for branch_forward.1']
    #allocation11 [shape = 'u8[1024]{0}', space=vmem, size = 0x400, scoped, tag = 'output window, operand 0, single buffered']
    %16 = vsyncpa [#allocation5], 0
    %17 = vsyncpa [#allocation7], 0
    %18 = vsyncpa [#allocation10], 0
    %19 = vsyncpa [#allocation4], 0
    // Predicated region
    $region2: #{branch_forward.1} parent=1 // pred_check
      _
    $region3: #{branch_forward.1} parent=1 // pred_check_branch
      %21 = sbr.rel (0) target = $region5
    $region4: #{branch_forward.1} parent=1 // pred_region
      _
    $region5: #{branch_forward.1} parent=1 // pred_fallthru
      _
    // Predicated region
    $region6: #{branch_forward.1} parent=1 // pred_check
      _
    $region7: #{branch_forward.1} parent=1 // pred_check_branch
      %23 = sbr.rel (0) target = $region9
    $region8: #{branch_forward.1} parent=1 // pred_region
      %s25 = ssub.s32 16, 16
      %26 = vsyncadd [#allocation5], %s25
      %s28 = sshll.u32 %s1, 4
      %s29 = int_to_ptr.vmem [resolvable:$true] %s28
      %31 = dma.vmem_to_smem %s29, 16, [#allocation3], [#allocation5]
    $region9: #{branch_forward.1} parent=1 // pred_fallthru
      _
    // Predicated region
    $region10: #{branch_forward.1} parent=1 // pred_check
      _
    $region11: #{branch_forward.1} parent=1 // pred_check_branch
      %33 = sbr.rel (0) target = $region13
    $region12: #{branch_forward.1} parent=1 // pred_region
      %s35 = ssub.s32 16, 16
      %36 = vsyncadd [#allocation7], %s35
      %s38 = sshll.u32 %s2, 4
      %s39 = int_to_ptr.vmem [resolvable:$true] %s38
      %41 = dma.vmem_to_smem %s39, 16, [#allocation6], [#allocation7]
    $region13: #{branch_forward.1} parent=1 // pred_fallthru
      _
    // Predicated region
    $region14: #{branch_forward.1} parent=1 // pred_check
      _
    $region15: #{branch_forward.1} parent=1 // pred_check_branch
      %43 = sbr.rel (0) target = $region17
    $region16: #{branch_forward.1} parent=1 // pred_region
      %s45 = ssub.s32 16, 16
      %46 = vsyncadd [#allocation7], %s45
      %s48 = sshll.u32 %s3, 4
      %s49 = int_to_ptr.vmem [resolvable:$true] %s48
      %51 = dma.vmem_to_smem %s49, 16, [#allocation8], [#allocation7]
    $region17: #{branch_forward.1} parent=1 // pred_fallthru
      _
    // Predicated region
    $region18: #{branch_forward.1} parent=1 // pred_check
      _
    $region19: #{branch_forward.1} parent=1 // pred_check_branch
      %53 = sbr.rel (0) target = $region21
    $region20: #{branch_forward.1} parent=1 // pred_region
      %s55 = ssub.s32 16, 16
      %56 = vsyncadd [#allocation10], %s55
      %s58 = sshll.u32 %s4, 4
      %s59 = int_to_ptr.vmem [resolvable:$true] %s58
      %61 = dma.vmem_to_smem %s59, 16, [#allocation9], [#allocation10]
    $region21: #{branch_forward.1} parent=1 // pred_fallthru
      _
    // Predicated region
    $region22: #{branch_forward.1} parent=1 // pred_check
      _
    $region23: #{branch_forward.1} parent=1 // pred_check_branch
      %63 = sbr.rel (0) target = $region25
    $region24: #{branch_forward.1} parent=1 // pred_region
      _
    $region25: #{branch_forward.1} parent=1 // pred_fallthru
      _
    // Predicated region
    $region26: #{branch_forward.1} parent=1 // pred_check
      _
    $region27: #{branch_forward.1} parent=1 // pred_check_branch
      %65 = sbr.rel (0) target = $region29
    $region28: #{branch_forward.1} parent=1 // pred_region
      _
    $region29: #{branch_forward.1} parent=1 // pred_fallthru
      _
    // Predicated region
    $region30: #{branch_forward.1} parent=1 // pred_check
      _
    $region31: #{branch_forward.1} parent=1 // pred_check_branch
      %67 = sbr.rel (0) target = $region33
    $region32: #{branch_forward.1} parent=1 // pred_region
      _
    $region33: #{branch_forward.1} parent=1 // pred_fallthru
      _
    // Predicated region
    $region34: #{branch_forward.1} parent=1 // pred_check
      _
    $region35: #{branch_forward.1} parent=1 // pred_check_branch
      %69 = sbr.rel (0) target = $region37
    $region36: #{branch_forward.1} parent=1 // pred_region
      _
    $region37: #{branch_forward.1} parent=1 // pred_fallthru
      _
    // Predicated region
    $region38: #{branch_forward.1} parent=1 // pred_check
      _
    $region39: #{branch_forward.1} parent=1 // pred_check_branch
      %71 = sbr.rel (0) target = $region41
    $region40: #{branch_forward.1} parent=1 // pred_region
      _
    $region41: #{branch_forward.1} parent=1 // pred_fallthru
      _
    // Predicated region
    $region42: #{branch_forward.1} parent=1 // pred_check
      _
    $region43: #{branch_forward.1} parent=1 // pred_check_branch
      %73 = sbr.rel (0) target = $region45
    $region44: #{branch_forward.1} parent=1 // pred_region
      _
    $region45: #{branch_forward.1} parent=1 // pred_fallthru
      _
    // Predicated region
    $region46: #{branch_forward.1} parent=1 // pred_check
      _
    $region47: #{branch_forward.1} parent=1 // pred_check_branch
      %75 = sbr.rel (0) target = $region49
    $region48: #{branch_forward.1} parent=1 // pred_region
      %76 = dma.done [#allocation5], 16
    $region49: #{branch_forward.1} parent=1 // pred_fallthru
      _
    // Predicated region
    $region50: #{branch_forward.1} parent=1 // pred_check
      _
    $region51: #{branch_forward.1} parent=1 // pred_check_branch
      %78 = sbr.rel (0) target = $region53
    $region52: #{branch_forward.1} parent=1 // pred_region
      %79 = dma.done [#allocation7], 16
    $region53: #{branch_forward.1} parent=1 // pred_fallthru
      _
    // Predicated region
    $region54: #{branch_forward.1} parent=1 // pred_check
      _
    $region55: #{branch_forward.1} parent=1 // pred_check_branch
      %81 = sbr.rel (0) target = $region57
    $region56: #{branch_forward.1} parent=1 // pred_region
      %82 = dma.done [#allocation7], 16
    $region57: #{branch_forward.1} parent=1 // pred_fallthru
      _
    // Predicated region
    $region58: #{branch_forward.1} parent=1 // pred_check
      _
    $region59: #{branch_forward.1} parent=1 // pred_check_branch
      %84 = sbr.rel (0) target = $region61
    $region60: #{branch_forward.1} parent=1 // pred_region
      %85 = dma.done [#allocation10], 16
    $region61: #{branch_forward.1} parent=1 // pred_fallthru
      _
    %86 = sfence
    %87 = vst [vmem:[#allocation2] sm:$0x3] 0.0
    %88 = vst [vmem:[#allocation2 + $0x2] sm:$0x3] 0.0
    %89 = vst [vmem:[#allocation2 + $0x4] sm:$0x3] 0.0
    %v90 = vld [vmem:[%s0] sm:$0x1]
    %v91 = vld [vmem:[%s0 + $0x4] sm:$0x1]
    %v94 = vrot.slane %v91, 7
    %vm95 = vcmask 1041409
    %v96 = vsel %vm95, %v94, %v90
    %vm98 = vcmask 820224
    %99 = vst.msk [vmem:[#allocation2] sm:$0x3] %vm98, %v96
    %v100 = vld [vmem:[%s0 + $0x1] sm:$0x1]
    %v101 = vld [vmem:[%s0 + $0x5] sm:$0x1]
    %v104 = vrot.slane %v101, 7
    %v105 = vsel %vm95, %v104, %v100
    %s107 = scalar_lea.vmem [#allocation2], 2
    %108 = vst.msk [vmem:[%s107] sm:$0x3] %vm98, %v105
    %v109 = vld [vmem:[%s0 + $0x2] sm:$0x1]
    %v110 = vld [vmem:[%s0 + $0x6] sm:$0x1]
    %v113 = vrot.slane %v110, 7
    %v114 = vsel %vm95, %v113, %v109
    %s116 = scalar_lea.vmem [#allocation2], 4
    %117 = vst.msk [vmem:[%s116] sm:$0x3] %vm98, %v114
    %v118 = vlaneseq
    %v119 = vand.u32 %v118, 127
    %vm120 = vcmp.lt.s32.totalorder %v119, 101
    %v121 = vld [vmem:[#allocation2] sm:$0x3]
    %v122 = vld [vmem:[%s107] sm:$0x3]
    %v123 = vld [vmem:[%s116] sm:$0x3]
    %124 = vrot.lane.b32.xlu0 %v121, 1
    %v125 = vpop.permute.xlu0 %124
    %126 = vrot.lane.b32.xlu0 %v121, 127
    %v127 = vpop.permute.xlu0 %126
    %128 = vrot.lane.b32.xlu0 %v122, 1
    %v129 = vpop.permute.xlu0 %128
    %130 = vrot.lane.b32.xlu0 %v122, 127
    %v131 = vpop.permute.xlu0 %130
    %132 = vrot.lane.b32.xlu0 %v123, 1
    %v133 = vpop.permute.xlu0 %132
    %134 = vrot.lane.b32.xlu0 %v123, 127
    %v135 = vpop.permute.xlu0 %134
    %s136 = sld [smem:[#allocation6]]
    %v137 = vstv %s136
    %v138 = vadd.f32 %v137, 0.0
    %s139 = sld [smem:[#allocation3]]
    %v140 = vstv %s139
    %v141 = vmul.f32 %v140, %v125
    %v142 = vadd.f32 %v138, %v141
    %s143 = sld [smem:[#allocation3 + $0x1]]
    %v144 = vstv %s143
    %v145 = vmul.f32 %v144, %v121
    %v146 = vadd.f32 %v142, %v145
    %s147 = sld [smem:[#allocation3 + $0x2]]
    %v148 = vstv %s147
    %v149 = vmul.f32 %v148, %v127
    %v150 = vadd.f32 %v146, %v149
    %s151 = sld [smem:[#allocation3 + $0x3]]
    %v152 = vstv %s151
    %v153 = vmul.f32 %v152, %v129
    %v154 = vadd.f32 %v150, %v153
    %s155 = sld [smem:[#allocation3 + $0x4]]
    %v156 = vstv %s155
    %v157 = vmul.f32 %v156, %v122
    %v158 = vadd.f32 %v154, %v157
    %s159 = sld [smem:[#allocation3 + $0x5]]
    %v160 = vstv %s159
    %v161 = vmul.f32 %v160, %v131
    %v162 = vadd.f32 %v158, %v161
    %s163 = sld [smem:[#allocation3 + $0x6]]
    %v164 = vstv %s163
    %v165 = vmul.f32 %v164, %v133
    %v166 = vadd.f32 %v162, %v165
    %s167 = sld [smem:[#allocation3 + $0x7]]
    %v168 = vstv %s167
    %v169 = vmul.f32 %v168, %v123
    %v170 = vadd.f32 %v166, %v169
    %s171 = sld [smem:[#allocation3 + $0x8]]
    %v172 = vstv %s171
    %v173 = vmul.f32 %v172, %v135
    %v174 = vadd.f32 %v170, %v173
    %v175 = vtanh.pop %v174
    %v176 = vsel %vm120, %v175, 0.0
    %s177 = sld [smem:[#allocation6 + $0x1]]
    %v178 = vstv %s177
    %v179 = vadd.f32 %v178, 0.0
    %s180 = sld [smem:[#allocation3 + $0x9]]
    %v181 = vstv %s180
    %v182 = vmul.f32 %v181, %v125
    %v183 = vadd.f32 %v179, %v182
    %s184 = sld [smem:[#allocation3 + $0xa]]
    %v185 = vstv %s184
    %v186 = vmul.f32 %v185, %v121
    %v187 = vadd.f32 %v183, %v186
    %s188 = sld [smem:[#allocation3 + $0xb]]
    %v189 = vstv %s188
    %v190 = vmul.f32 %v189, %v127
    %v191 = vadd.f32 %v187, %v190
    %s192 = sld [smem:[#allocation3 + $0xc]]
    %v193 = vstv %s192
    %v194 = vmul.f32 %v193, %v129
    %v195 = vadd.f32 %v191, %v194
    %s196 = sld [smem:[#allocation3 + $0xd]]
    %v197 = vstv %s196
    %v198 = vmul.f32 %v197, %v122
    %v199 = vadd.f32 %v195, %v198
    %s200 = sld [smem:[#allocation3 + $0xe]]
    %v201 = vstv %s200
    %v202 = vmul.f32 %v201, %v131
    %v203 = vadd.f32 %v199, %v202
    %s204 = sld [smem:[#allocation3 + $0xf]]
    %v205 = vstv %s204
    %v206 = vmul.f32 %v205, %v133
    %v207 = vadd.f32 %v203, %v206
    %s208 = sld [smem:[#allocation3 + $0x10]]
    %v209 = vstv %s208
    %v210 = vmul.f32 %v209, %v123
    %v211 = vadd.f32 %v207, %v210
    %s212 = sld [smem:[#allocation3 + $0x11]]
    %v213 = vstv %s212
    %v214 = vmul.f32 %v213, %v135
    %v215 = vadd.f32 %v211, %v214
    %v216 = vtanh.pop %v215
    %v217 = vsel %vm120, %v216, 0.0
    %s218 = sld [smem:[#allocation6 + $0x2]]
    %v219 = vstv %s218
    %v220 = vadd.f32 %v219, 0.0
    %s221 = sld [smem:[#allocation3 + $0x12]]
    %v222 = vstv %s221
    %v223 = vmul.f32 %v222, %v125
    %v224 = vadd.f32 %v220, %v223
    %s225 = sld [smem:[#allocation3 + $0x13]]
    %v226 = vstv %s225
    %v227 = vmul.f32 %v226, %v121
    %v228 = vadd.f32 %v224, %v227
    %s229 = sld [smem:[#allocation3 + $0x14]]
    %v230 = vstv %s229
    %v231 = vmul.f32 %v230, %v127
    %v232 = vadd.f32 %v228, %v231
    %s233 = sld [smem:[#allocation3 + $0x15]]
    %v234 = vstv %s233
    %v235 = vmul.f32 %v234, %v129
    %v236 = vadd.f32 %v232, %v235
    %s237 = sld [smem:[#allocation3 + $0x16]]
    %v238 = vstv %s237
    %v239 = vmul.f32 %v238, %v122
    %v240 = vadd.f32 %v236, %v239
    %s241 = sld [smem:[#allocation3 + $0x17]]
    %v242 = vstv %s241
    %v243 = vmul.f32 %v242, %v131
    %v244 = vadd.f32 %v240, %v243
    %s245 = sld [smem:[#allocation3 + $0x18]]
    %v246 = vstv %s245
    %v247 = vmul.f32 %v246, %v133
    %v248 = vadd.f32 %v244, %v247
    %s249 = sld [smem:[#allocation3 + $0x19]]
    %v250 = vstv %s249
    %v251 = vmul.f32 %v250, %v123
    %v252 = vadd.f32 %v248, %v251
    %s253 = sld [smem:[#allocation3 + $0x1a]]
    %v254 = vstv %s253
    %v255 = vmul.f32 %v254, %v135
    %v256 = vadd.f32 %v252, %v255
    %v257 = vtanh.pop %v256
    %v258 = vsel %vm120, %v257, 0.0
    %s259 = sld [smem:[#allocation6 + $0x3]]
    %v260 = vstv %s259
    %v261 = vadd.f32 %v260, 0.0
    %s262 = sld [smem:[#allocation3 + $0x1b]]
    %v263 = vstv %s262
    %v264 = vmul.f32 %v263, %v125
    %v265 = vadd.f32 %v261, %v264
    %s266 = sld [smem:[#allocation3 + $0x1c]]
    %v267 = vstv %s266
    %v268 = vmul.f32 %v267, %v121
    %v269 = vadd.f32 %v265, %v268
    %s270 = sld [smem:[#allocation3 + $0x1d]]
    %v271 = vstv %s270
    %v272 = vmul.f32 %v271, %v127
    %v273 = vadd.f32 %v269, %v272
    %s274 = sld [smem:[#allocation3 + $0x1e]]
    %v275 = vstv %s274
    %v276 = vmul.f32 %v275, %v129
    %v277 = vadd.f32 %v273, %v276
    %s278 = sld [smem:[#allocation3 + $0x1f]]
    %v279 = vstv %s278
    %v280 = vmul.f32 %v279, %v122
    %v281 = vadd.f32 %v277, %v280
    %s282 = sld [smem:[#allocation3 + $0x20]]
    %v283 = vstv %s282
    %v284 = vmul.f32 %v283, %v131
    %v285 = vadd.f32 %v281, %v284
    %s286 = sld [smem:[#allocation3 + $0x21]]
    %v287 = vstv %s286
    %v288 = vmul.f32 %v287, %v133
    %v289 = vadd.f32 %v285, %v288
    %s290 = sld [smem:[#allocation3 + $0x22]]
    %v291 = vstv %s290
    %v292 = vmul.f32 %v291, %v123
    %v293 = vadd.f32 %v289, %v292
    %s294 = sld [smem:[#allocation3 + $0x23]]
    %v295 = vstv %s294
    %v296 = vmul.f32 %v295, %v135
    %v297 = vadd.f32 %v293, %v296
    %v298 = vtanh.pop %v297
    %v299 = vsel %vm120, %v298, 0.0
    %300 = vrot.lane.b32.xlu0 %v176, 1
    %v301 = vpop.permute.xlu0 %300
    %302 = vrot.lane.b32.xlu0 %v176, 127
    %v303 = vpop.permute.xlu0 %302
    %304 = vrot.lane.b32.xlu0 %v217, 1
    %v305 = vpop.permute.xlu0 %304
    %306 = vrot.lane.b32.xlu0 %v217, 127
    %v307 = vpop.permute.xlu0 %306
    %308 = vrot.lane.b32.xlu0 %v258, 1
    %v309 = vpop.permute.xlu0 %308
    %310 = vrot.lane.b32.xlu0 %v258, 127
    %v311 = vpop.permute.xlu0 %310
    %312 = vrot.lane.b32.xlu0 %v299, 1
    %v313 = vpop.permute.xlu0 %312
    %314 = vrot.lane.b32.xlu0 %v299, 127
    %v315 = vpop.permute.xlu0 %314
    %s316 = sld [smem:[#allocation9]]
    %v317 = vstv %s316
    %v318 = vadd.f32 %v317, 0.0
    %s319 = sld [smem:[#allocation8]]
    %v320 = vstv %s319
    %v321 = vmul.f32 %v320, %v301
    %v322 = vadd.f32 %v318, %v321
    %s323 = sld [smem:[#allocation8 + $0x1]]
    %v324 = vstv %s323
    %v325 = vmul.f32 %v324, %v176
    %v326 = vadd.f32 %v322, %v325
    %s327 = sld [smem:[#allocation8 + $0x2]]
    %v328 = vstv %s327
    %v329 = vmul.f32 %v328, %v303
    %v330 = vadd.f32 %v326, %v329
    %s331 = sld [smem:[#allocation8 + $0x3]]
    %v332 = vstv %s331
    %v333 = vmul.f32 %v332, %v305
    %v334 = vadd.f32 %v330, %v333
    %s335 = sld [smem:[#allocation8 + $0x4]]
    %v336 = vstv %s335
    %v337 = vmul.f32 %v336, %v217
    %v338 = vadd.f32 %v334, %v337
    %s339 = sld [smem:[#allocation8 + $0x5]]
    %v340 = vstv %s339
    %v341 = vmul.f32 %v340, %v307
    %v342 = vadd.f32 %v338, %v341
    %s343 = sld [smem:[#allocation8 + $0x6]]
    %v344 = vstv %s343
    %v345 = vmul.f32 %v344, %v309
    %v346 = vadd.f32 %v342, %v345
    %s347 = sld [smem:[#allocation8 + $0x7]]
    %v348 = vstv %s347
    %v349 = vmul.f32 %v348, %v258
    %v350 = vadd.f32 %v346, %v349
    %s351 = sld [smem:[#allocation8 + $0x8]]
    %v352 = vstv %s351
    %v353 = vmul.f32 %v352, %v311
    %v354 = vadd.f32 %v350, %v353
    %s355 = sld [smem:[#allocation8 + $0x9]]
    %v356 = vstv %s355
    %v357 = vmul.f32 %v356, %v313
    %v358 = vadd.f32 %v354, %v357
    %s359 = sld [smem:[#allocation8 + $0xa]]
    %v360 = vstv %s359
    %v361 = vmul.f32 %v360, %v299
    %v362 = vadd.f32 %v358, %v361
    %s363 = sld [smem:[#allocation8 + $0xb]]
    %v364 = vstv %s363
    %v365 = vmul.f32 %v364, %v315
    %v366 = vadd.f32 %v362, %v365
    %v367 = vtanh.pop %v366
    %s368 = sld [smem:[#allocation9 + $0x1]]
    %v369 = vstv %s368
    %v370 = vadd.f32 %v369, 0.0
    %s371 = sld [smem:[#allocation8 + $0xc]]
    %v372 = vstv %s371
    %v373 = vmul.f32 %v372, %v301
    %v374 = vadd.f32 %v370, %v373
    %s375 = sld [smem:[#allocation8 + $0xd]]
    %v376 = vstv %s375
    %v377 = vmul.f32 %v376, %v176
    %v378 = vadd.f32 %v374, %v377
    %s379 = sld [smem:[#allocation8 + $0xe]]
    %v380 = vstv %s379
    %v381 = vmul.f32 %v380, %v303
    %v382 = vadd.f32 %v378, %v381
    %s383 = sld [smem:[#allocation8 + $0xf]]
    %v384 = vstv %s383
    %v385 = vmul.f32 %v384, %v305
    %v386 = vadd.f32 %v382, %v385
    %s387 = sld [smem:[#allocation8 + $0x10]]
    %v388 = vstv %s387
    %v389 = vmul.f32 %v388, %v217
    %v390 = vadd.f32 %v386, %v389
    %s391 = sld [smem:[#allocation8 + $0x11]]
    %v392 = vstv %s391
    %v393 = vmul.f32 %v392, %v307
    %v394 = vadd.f32 %v390, %v393
    %s395 = sld [smem:[#allocation8 + $0x12]]
    %v396 = vstv %s395
    %v397 = vmul.f32 %v396, %v309
    %v398 = vadd.f32 %v394, %v397
    %s399 = sld [smem:[#allocation8 + $0x13]]
    %v400 = vstv %s399
    %v401 = vmul.f32 %v400, %v258
    %v402 = vadd.f32 %v398, %v401
    %s403 = sld [smem:[#allocation8 + $0x14]]
    %v404 = vstv %s403
    %v405 = vmul.f32 %v404, %v311
    %v406 = vadd.f32 %v402, %v405
    %s407 = sld [smem:[#allocation8 + $0x15]]
    %v408 = vstv %s407
    %v409 = vmul.f32 %v408, %v313
    %v410 = vadd.f32 %v406, %v409
    %s411 = sld [smem:[#allocation8 + $0x16]]
    %v412 = vstv %s411
    %v413 = vmul.f32 %v412, %v299
    %v414 = vadd.f32 %v410, %v413
    %s415 = sld [smem:[#allocation8 + $0x17]]
    %v416 = vstv %s415
    %v417 = vmul.f32 %v416, %v315
    %v418 = vadd.f32 %v414, %v417
    %v419 = vtanh.pop %v418
    %s420 = sld [smem:[#allocation9 + $0x2]]
    %v421 = vstv %s420
    %v422 = vadd.f32 %v421, 0.0
    %s423 = sld [smem:[#allocation8 + $0x18]]
    %v424 = vstv %s423
    %v425 = vmul.f32 %v424, %v301
    %v426 = vadd.f32 %v422, %v425
    %s427 = sld [smem:[#allocation8 + $0x19]]
    %v428 = vstv %s427
    %v429 = vmul.f32 %v428, %v176
    %v430 = vadd.f32 %v426, %v429
    %s431 = sld [smem:[#allocation8 + $0x1a]]
    %v432 = vstv %s431
    %v433 = vmul.f32 %v432, %v303
    %v434 = vadd.f32 %v430, %v433
    %s435 = sld [smem:[#allocation8 + $0x1b]]
    %v436 = vstv %s435
    %v437 = vmul.f32 %v436, %v305
    %v438 = vadd.f32 %v434, %v437
    %s439 = sld [smem:[#allocation8 + $0x1c]]
    %v440 = vstv %s439
    %v441 = vmul.f32 %v440, %v217
    %v442 = vadd.f32 %v438, %v441
    %s443 = sld [smem:[#allocation8 + $0x1d]]
    %v444 = vstv %s443
    %v445 = vmul.f32 %v444, %v307
    %v446 = vadd.f32 %v442, %v445
    %s447 = sld [smem:[#allocation8 + $0x1e]]
    %v448 = vstv %s447
    %v449 = vmul.f32 %v448, %v309
    %v450 = vadd.f32 %v446, %v449
    %s451 = sld [smem:[#allocation8 + $0x1f]]
    %v452 = vstv %s451
    %v453 = vmul.f32 %v452, %v258
    %v454 = vadd.f32 %v450, %v453
    %s455 = sld [smem:[#allocation8 + $0x20]]
    %v456 = vstv %s455
    %v457 = vmul.f32 %v456, %v311
    %v458 = vadd.f32 %v454, %v457
    %s459 = sld [smem:[#allocation8 + $0x21]]
    %v460 = vstv %s459
    %v461 = vmul.f32 %v460, %v313
    %v462 = vadd.f32 %v458, %v461
    %s463 = sld [smem:[#allocation8 + $0x22]]
    %v464 = vstv %s463
    %v465 = vmul.f32 %v464, %v299
    %v466 = vadd.f32 %v462, %v465
    %s467 = sld [smem:[#allocation8 + $0x23]]
    %v468 = vstv %s467
    %v469 = vmul.f32 %v468, %v315
    %v470 = vadd.f32 %v466, %v469
    %v471 = vtanh.pop %v470
    %s472 = sld [smem:[#allocation9 + $0x3]]
    %v473 = vstv %s472
    %v474 = vadd.f32 %v473, 0.0
    %s475 = sld [smem:[#allocation8 + $0x24]]
    %v476 = vstv %s475
    %v477 = vmul.f32 %v476, %v301
    %v478 = vadd.f32 %v474, %v477
    %s479 = sld [smem:[#allocation8 + $0x25]]
    %v480 = vstv %s479
    %v481 = vmul.f32 %v480, %v176
    %v482 = vadd.f32 %v478, %v481
    %s483 = sld [smem:[#allocation8 + $0x26]]
    %v484 = vstv %s483
    %v485 = vmul.f32 %v484, %v303
    %v486 = vadd.f32 %v482, %v485
    %s487 = sld [smem:[#allocation8 + $0x27]]
    %v488 = vstv %s487
    %v489 = vmul.f32 %v488, %v305
    %v490 = vadd.f32 %v486, %v489
    %s491 = sld [smem:[#allocation8 + $0x28]]
    %v492 = vstv %s491
    %v493 = vmul.f32 %v492, %v217
    %v494 = vadd.f32 %v490, %v493
    %s495 = sld [smem:[#allocation8 + $0x29]]
    %v496 = vstv %s495
    %v497 = vmul.f32 %v496, %v307
    %v498 = vadd.f32 %v494, %v497
    %s499 = sld [smem:[#allocation8 + $0x2a]]
    %v500 = vstv %s499
    %v501 = vmul.f32 %v500, %v309
    %v502 = vadd.f32 %v498, %v501
    %s503 = sld [smem:[#allocation8 + $0x2b]]
    %v504 = vstv %s503
    %v505 = vmul.f32 %v504, %v258
    %v506 = vadd.f32 %v502, %v505
    %s507 = sld [smem:[#allocation8 + $0x2c]]
    %v508 = vstv %s507
    %v509 = vmul.f32 %v508, %v311
    %v510 = vadd.f32 %v506, %v509
    %s511 = sld [smem:[#allocation8 + $0x2d]]
    %v512 = vstv %s511
    %v513 = vmul.f32 %v512, %v313
    %v514 = vadd.f32 %v510, %v513
    %s515 = sld [smem:[#allocation8 + $0x2e]]
    %v516 = vstv %s515
    %v517 = vmul.f32 %v516, %v299
    %v518 = vadd.f32 %v514, %v517
    %s519 = sld [smem:[#allocation8 + $0x2f]]
    %v520 = vstv %s519
    %v521 = vmul.f32 %v520, %v315
    %v522 = vadd.f32 %v518, %v521
    %v523 = vtanh.pop %v522
    %v524 = vld [vmem:[%s5] sm:$0xff]
    %v525 = vld [vmem:[%s5 + $0x8] sm:$0xff]
    %v526 = vld [vmem:[%s5 + $0x10] sm:$0xff]
    %v527 = vld [vmem:[%s5 + $0x18] sm:$0xff]
    %v528 = vld [vmem:[%s5 + $0x20] sm:$0xff]
    %v529 = vld [vmem:[%s5 + $0x28] sm:$0xff]
    %v530 = vld [vmem:[%s5 + $0x30] sm:$0xff]
    %v531 = vld [vmem:[%s5 + $0x38] sm:$0xff]
    %v532 = vld [vmem:[%s5 + $0x40] sm:$0xff]
    %v533 = vld [vmem:[%s5 + $0x48] sm:$0xff]
    %v534 = vld [vmem:[%s5 + $0x50] sm:$0xff]
    %v535 = vld [vmem:[%s5 + $0x58] sm:$0xff]
    %v536 = vld [vmem:[%s5 + $0x60] sm:$0xff]
    %v537 = vld [vmem:[%s5 + $0x68] sm:$0xff]
    %v538 = vld [vmem:[%s5 + $0x70] sm:$0xff]
    %v539 = vld [vmem:[%s5 + $0x78] sm:$0xff]
    %v540 = vld [vmem:[%s5 + $0x80] sm:$0xff]
    %v541 = vld [vmem:[%s5 + $0x88] sm:$0xff]
    %v542 = vld [vmem:[%s5 + $0x90] sm:$0xff]
    %v543 = vld [vmem:[%s5 + $0x98] sm:$0xff]
    %v544 = vld [vmem:[%s5 + $0xa0] sm:$0xff]
    %v545 = vld [vmem:[%s5 + $0xa8] sm:$0xff]
    %v546 = vld [vmem:[%s5 + $0xb0] sm:$0xff]
    %v547 = vld [vmem:[%s5 + $0xb8] sm:$0xff]
    %v548 = vld [vmem:[%s5 + $0xc0] sm:$0xff]
    %v549 = vld [vmem:[%s5 + $0xc8] sm:$0xff]
    %v550 = vld [vmem:[%s5 + $0xd0] sm:$0xff]
    %v551 = vld [vmem:[%s5 + $0xd8] sm:$0xff]
    %v552 = vld [vmem:[%s5 + $0xe0] sm:$0xff]
    %v553 = vld [vmem:[%s5 + $0xe8] sm:$0xff]
    %v554 = vld [vmem:[%s5 + $0xf0] sm:$0xff]
    %v555 = vld [vmem:[%s5 + $0xf8] sm:$0xff]
    %v556 = vld [vmem:[%s5 + $0x100] sm:$0xff]
    %v557 = vld [vmem:[%s5 + $0x108] sm:$0xff]
    %v558 = vld [vmem:[%s5 + $0x110] sm:$0xff]
    %v559 = vld [vmem:[%s5 + $0x118] sm:$0xff]
    %v560 = vld [vmem:[%s5 + $0x120] sm:$0xff]
    %v561 = vld [vmem:[%s5 + $0x128] sm:$0xff]
    %v562 = vld [vmem:[%s5 + $0x130] sm:$0xff]
    %v563 = vld [vmem:[%s5 + $0x138] sm:$0xff]
    %v564 = vld [vmem:[%s5 + $0x140] sm:$0xff]
    %v565 = vld [vmem:[%s5 + $0x148] sm:$0xff]
    %v566 = vld [vmem:[%s5 + $0x150] sm:$0xff]
    %v567 = vld [vmem:[%s5 + $0x158] sm:$0xff]
    %v568 = vld [vmem:[%s5 + $0x160] sm:$0xff]
    %v569 = vld [vmem:[%s5 + $0x168] sm:$0xff]
    %v570 = vld [vmem:[%s5 + $0x170] sm:$0xff]
    %v571 = vld [vmem:[%s5 + $0x178] sm:$0xff]
    %v572 = vld [vmem:[%s5 + $0x180] sm:$0xff]
    %v573 = vld [vmem:[%s5 + $0x188] sm:$0xff]
    %v574 = vld [vmem:[%s5 + $0x190] sm:$0xff]
    %v575 = vld [vmem:[%s5 + $0x198] sm:$0xff]
    %v576 = vld [vmem:[%s5 + $0x1a0] sm:$0xff]
    %v577 = vld [vmem:[%s5 + $0x1a8] sm:$0xff]
    %v578 = vld [vmem:[%s5 + $0x1b0] sm:$0xff]
    %v579 = vld [vmem:[%s5 + $0x1b8] sm:$0xff]
    %v580 = vld [vmem:[%s5 + $0x1c0] sm:$0xff]
    %v581 = vld [vmem:[%s5 + $0x1c8] sm:$0xff]
    %v582 = vld [vmem:[%s5 + $0x1d0] sm:$0xff]
    %v583 = vld [vmem:[%s5 + $0x1d8] sm:$0xff]
    %v584 = vld [vmem:[%s5 + $0x1e0] sm:$0xff]
    %v585 = vld [vmem:[%s5 + $0x1e8] sm:$0xff]
    %v586 = vld [vmem:[%s5 + $0x1f0] sm:$0xff]
    %v587 = vld [vmem:[%s5 + $0x1f8] sm:$0xff]
    %v588 = vld [vmem:[%s6] sm:$0x1]
    %v590 = vlaneseq
    %v591 = vshrl.u32 %v590, 7
    %v592 = vsub.s32 0, %v591
    %v593 = vrot.slane %v588, %v592
    %595 = vmatprep.subr.mxu0 0.0
    %596 = vmatpush1.msra.mxu0 %v524
    %597 = vmatprep.subr.mxu0 0.0
    %598 = vmatpush1.msra.mxu0 %v525
    %599 = vmatprep.subr.mxu0 0.0
    %600 = vmatpush1.msra.mxu0 %v526
    %601 = vmatprep.subr.mxu0 0.0
    %602 = vmatpush1.msra.mxu0 %v527
    %603 = vmatprep.subr.mxu0 0.0
    %604 = vmatpush1.msra.mxu0 %v528
    %605 = vmatprep.subr.mxu0 0.0
    %606 = vmatpush1.msra.mxu0 %v529
    %607 = vmatprep.subr.mxu0 0.0
    %608 = vmatpush1.msra.mxu0 %v530
    %609 = vmatprep.subr.mxu0 0.0
    %610 = vmatpush1.msra.mxu0 %v531
    %611 = vmatprep.subr.mxu0 0.0
    %612 = vmatpush1.msra.mxu0 %v532
    %613 = vmatprep.subr.mxu0 0.0
    %614 = vmatpush1.msra.mxu0 %v533
    %615 = vmatprep.subr.mxu0 0.0
    %616 = vmatpush1.msra.mxu0 %v534
    %617 = vmatprep.subr.mxu0 0.0
    %618 = vmatpush1.msra.mxu0 %v535
    %619 = vmatprep.subr.mxu0 0.0
    %620 = vmatpush1.msra.mxu0 %v536
    %621 = vmatprep.subr.mxu0 0.0
    %622 = vmatpush1.msra.mxu0 %v537
    %623 = vmatprep.subr.mxu0 0.0
    %624 = vmatpush1.msra.mxu0 %v538
    %625 = vmatprep.subr.mxu0 0.0
    %626 = vmatpush1.msra.mxu0 %v539
    %627 = vmatprep.subr.mxu0 0.0
    %628 = vmatpush1.msra.mxu0 %v540
    %629 = vmatprep.subr.mxu0 0.0
    %630 = vmatpush1.msra.mxu0 %v541
    %631 = vmatprep.subr.mxu0 0.0
    %632 = vmatpush1.msra.mxu0 %v542
    %633 = vmatprep.subr.mxu0 0.0
    %634 = vmatpush1.msra.mxu0 %v543
    %635 = vmatprep.subr.mxu0 0.0
    %636 = vmatpush1.msra.mxu0 %v544
    %637 = vmatprep.subr.mxu0 0.0
    %638 = vmatpush1.msra.mxu0 %v545
    %639 = vmatprep.subr.mxu0 0.0
    %640 = vmatpush1.msra.mxu0 %v546
    %641 = vmatprep.subr.mxu0 0.0
    %642 = vmatpush1.msra.mxu0 %v547
    %643 = vmatprep.subr.mxu0 0.0
    %644 = vmatpush1.msra.mxu0 %v548
    %645 = vmatprep.subr.mxu0 0.0
    %646 = vmatpush1.msra.mxu0 %v549
    %647 = vmatprep.subr.mxu0 0.0
    %648 = vmatpush1.msra.mxu0 %v550
    %649 = vmatprep.subr.mxu0 0.0
    %650 = vmatpush1.msra.mxu0 %v551
    %651 = vmatprep.subr.mxu0 0.0
    %652 = vmatpush1.msra.mxu0 %v552
    %653 = vmatprep.subr.mxu0 0.0
    %654 = vmatpush1.msra.mxu0 %v553
    %655 = vmatprep.subr.mxu0 0.0
    %656 = vmatpush1.msra.mxu0 %v554
    %657 = vmatprep.subr.mxu0 0.0
    %658 = vmatpush1.msra.mxu0 %v555
    %659 = vmatprep.mubr.f32.mxu0 %v419
    %660 = vmatmul.mubr.f32.gmra.mrb[0].mxu0 %v367
    %v661 = vpop.f32.mrb[0].mxu0
    %v662 = vadd.f32 %v593, %v661
    %v663 = vpop.f32.mrb[0].mxu0
    %664 = vdwg.mxu0
    %665 = vmatprep.subr.mxu0 0.0
    %666 = vmatpush1.msra.mxu0 %v556
    %667 = vmatprep.subr.mxu0 0.0
    %668 = vmatpush1.msra.mxu0 %v557
    %669 = vmatprep.subr.mxu0 0.0
    %670 = vmatpush1.msra.mxu0 %v558
    %671 = vmatprep.subr.mxu0 0.0
    %672 = vmatpush1.msra.mxu0 %v559
    %673 = vmatprep.subr.mxu0 0.0
    %674 = vmatpush1.msra.mxu0 %v560
    %675 = vmatprep.subr.mxu0 0.0
    %676 = vmatpush1.msra.mxu0 %v561
    %677 = vmatprep.subr.mxu0 0.0
    %678 = vmatpush1.msra.mxu0 %v562
    %679 = vmatprep.subr.mxu0 0.0
    %680 = vmatpush1.msra.mxu0 %v563
    %681 = vmatprep.subr.mxu0 0.0
    %682 = vmatpush1.msra.mxu0 %v564
    %683 = vmatprep.subr.mxu0 0.0
    %684 = vmatpush1.msra.mxu0 %v565
    %685 = vmatprep.subr.mxu0 0.0
    %686 = vmatpush1.msra.mxu0 %v566
    %687 = vmatprep.subr.mxu0 0.0
    %688 = vmatpush1.msra.mxu0 %v567
    %689 = vmatprep.subr.mxu0 0.0
    %690 = vmatpush1.msra.mxu0 %v568
    %691 = vmatprep.subr.mxu0 0.0
    %692 = vmatpush1.msra.mxu0 %v569
    %693 = vmatprep.subr.mxu0 0.0
    %694 = vmatpush1.msra.mxu0 %v570
    %695 = vmatprep.subr.mxu0 0.0
    %696 = vmatpush1.msra.mxu0 %v571
    %697 = vmatprep.subr.mxu0 0.0
    %698 = vmatpush1.msra.mxu0 %v572
    %699 = vmatprep.subr.mxu0 0.0
    %700 = vmatpush1.msra.mxu0 %v573
    %701 = vmatprep.subr.mxu0 0.0
    %702 = vmatpush1.msra.mxu0 %v574
    %703 = vmatprep.subr.mxu0 0.0
    %704 = vmatpush1.msra.mxu0 %v575
    %705 = vmatprep.subr.mxu0 0.0
    %706 = vmatpush1.msra.mxu0 %v576
    %707 = vmatprep.subr.mxu0 0.0
    %708 = vmatpush1.msra.mxu0 %v577
    %709 = vmatprep.subr.mxu0 0.0
    %710 = vmatpush1.msra.mxu0 %v578
    %711 = vmatprep.subr.mxu0 0.0
    %712 = vmatpush1.msra.mxu0 %v579
    %713 = vmatprep.subr.mxu0 0.0
    %714 = vmatpush1.msra.mxu0 %v580
    %715 = vmatprep.subr.mxu0 0.0
    %716 = vmatpush1.msra.mxu0 %v581
    %717 = vmatprep.subr.mxu0 0.0
    %718 = vmatpush1.msra.mxu0 %v582
    %719 = vmatprep.subr.mxu0 0.0
    %720 = vmatpush1.msra.mxu0 %v583
    %721 = vmatprep.subr.mxu0 0.0
    %722 = vmatpush1.msra.mxu0 %v584
    %723 = vmatprep.subr.mxu0 0.0
    %724 = vmatpush1.msra.mxu0 %v585
    %725 = vmatprep.subr.mxu0 0.0
    %726 = vmatpush1.msra.mxu0 %v586
    %727 = vmatprep.subr.mxu0 0.0
    %728 = vmatpush1.msra.mxu0 %v587
    %729 = vmatprep.mubr.f32.mxu0 %v523
    %730 = vmatmul.mubr.f32.gmra.mrb[0].mxu0 %v471
    %v731 = vpop.f32.mrb[0].mxu0
    %v732 = vadd.f32 %v662, %v731
    %v733 = vpop.f32.mrb[0].mxu0
    %734 = vdwg.mxu0
    %v735 = vtanh.pop %v732
    %v736 = vld [vmem:[%s7] sm:$0xff]
    %v737 = vld [vmem:[%s7 + $0x8] sm:$0xff]
    %v738 = vld [vmem:[%s8] sm:$0x1]
    %v740 = vlaneseq
    %v741 = vshrl.u32 %v740, 7
    %v742 = vsub.s32 0, %v741
    %v743 = vrot.slane %v738, %v742
    %vm745 = vcmask 130048
    %v747 = vsel %vm745, %v735, 0
    %749 = vmatprep.subr.mxu0 0.0
    %750 = vmatpush1.msra.mxu0 %v736
    %751 = vmatprep.subr.mxu0 0.0
    %752 = vmatpush1.msra.mxu0 %v737
    %753 = vmatprep.subr.mxu0 0.0
    %754 = vmatpush1.msra.mxu0 0.0
    %755 = vmatprep.subr.mxu0 0.0
    %756 = vmatpush1.msra.mxu0 0.0
    %757 = vmatprep.subr.mxu0 0.0
    %758 = vmatpush1.msra.mxu0 0.0
    %759 = vmatprep.subr.mxu0 0.0
    %760 = vmatpush1.msra.mxu0 0.0
    %761 = vmatprep.subr.mxu0 0.0
    %762 = vmatpush1.msra.mxu0 0.0
    %763 = vmatprep.subr.mxu0 0.0
    %764 = vmatpush1.msra.mxu0 0.0
    %765 = vmatprep.subr.mxu0 0.0
    %766 = vmatpush1.msra.mxu0 0.0
    %767 = vmatprep.subr.mxu0 0.0
    %768 = vmatpush1.msra.mxu0 0.0
    %769 = vmatprep.subr.mxu0 0.0
    %770 = vmatpush1.msra.mxu0 0.0
    %771 = vmatprep.subr.mxu0 0.0
    %772 = vmatpush1.msra.mxu0 0.0
    %773 = vmatprep.subr.mxu0 0.0
    %774 = vmatpush1.msra.mxu0 0.0
    %775 = vmatprep.subr.mxu0 0.0
    %776 = vmatpush1.msra.mxu0 0.0
    %777 = vmatprep.subr.mxu0 0.0
    %778 = vmatpush1.msra.mxu0 0.0
    %779 = vmatprep.subr.mxu0 0.0
    %780 = vmatpush1.msra.mxu0 0.0
    %781 = vmatprep.subr.mxu0 0.0
    %782 = vmatpush1.msra.mxu0 0.0
    %783 = vmatprep.subr.mxu0 0.0
    %784 = vmatpush1.msra.mxu0 0.0
    %785 = vmatprep.subr.mxu0 0.0
    %786 = vmatpush1.msra.mxu0 0.0
    %787 = vmatprep.subr.mxu0 0.0
    %788 = vmatpush1.msra.mxu0 0.0
    %789 = vmatprep.subr.mxu0 0.0
    %790 = vmatpush1.msra.mxu0 0.0
    %791 = vmatprep.subr.mxu0 0.0
    %792 = vmatpush1.msra.mxu0 0.0
    %793 = vmatprep.subr.mxu0 0.0
    %794 = vmatpush1.msra.mxu0 0.0
    %795 = vmatprep.subr.mxu0 0.0
    %796 = vmatpush1.msra.mxu0 0.0
    %797 = vmatprep.subr.mxu0 0.0
    %798 = vmatpush1.msra.mxu0 0.0
    %799 = vmatprep.subr.mxu0 0.0
    %800 = vmatpush1.msra.mxu0 0.0
    %801 = vmatprep.subr.mxu0 0.0
    %802 = vmatpush1.msra.mxu0 0.0
    %803 = vmatprep.subr.mxu0 0.0
    %804 = vmatpush1.msra.mxu0 0.0
    %805 = vmatprep.subr.mxu0 0.0
    %806 = vmatpush1.msra.mxu0 0.0
    %807 = vmatprep.subr.mxu0 0.0
    %808 = vmatpush1.msra.mxu0 0.0
    %809 = vmatprep.subr.mxu0 0.0
    %810 = vmatpush1.msra.mxu0 0.0
    %811 = vmatprep.subr.mxu0 0.0
    %812 = vmatpush1.msra.mxu0 0.0
    %813 = vmatprep.mubr.f32.mxu0 0.0
    %814 = vmatmul.mubr.f32.gmra.mrb[0].mxu0 %v747
    %v815 = vpop.f32.mrb[0].mxu0
    %v816 = vadd.f32 %v743, %v815
    %v817 = vpop.f32.mrb[0].mxu0
    %818 = vdwg.mxu0
    %v819 = vtanh.pop %v816
    %v820 = vld [vmem:[%s9] sm:$0xff]
    %v821 = vld [vmem:[%s9 + $0x8] sm:$0xff]
    %v822 = vld [vmem:[%s10] sm:$0x1]
    %v824 = vlaneseq
    %v825 = vshrl.u32 %v824, 7
    %v826 = vsub.s32 0, %v825
    %v827 = vrot.slane %v822, %v826
    %v830 = vsel %vm745, %v819, 0
    %832 = vmatprep.subr.mxu0 0.0
    %833 = vmatpush1.msra.mxu0 %v820
    %834 = vmatprep.subr.mxu0 0.0
    %835 = vmatpush1.msra.mxu0 %v821
    %836 = vmatprep.subr.mxu0 0.0
    %837 = vmatpush1.msra.mxu0 0.0
    %838 = vmatprep.subr.mxu0 0.0
    %839 = vmatpush1.msra.mxu0 0.0
    %840 = vmatprep.subr.mxu0 0.0
    %841 = vmatpush1.msra.mxu0 0.0
    %842 = vmatprep.subr.mxu0 0.0
    %843 = vmatpush1.msra.mxu0 0.0
    %844 = vmatprep.subr.mxu0 0.0
    %845 = vmatpush1.msra.mxu0 0.0
    %846 = vmatprep.subr.mxu0 0.0
    %847 = vmatpush1.msra.mxu0 0.0
    %848 = vmatprep.subr.mxu0 0.0
    %849 = vmatpush1.msra.mxu0 0.0
    %850 = vmatprep.subr.mxu0 0.0
    %851 = vmatpush1.msra.mxu0 0.0
    %852 = vmatprep.subr.mxu0 0.0
    %853 = vmatpush1.msra.mxu0 0.0
    %854 = vmatprep.subr.mxu0 0.0
    %855 = vmatpush1.msra.mxu0 0.0
    %856 = vmatprep.subr.mxu0 0.0
    %857 = vmatpush1.msra.mxu0 0.0
    %858 = vmatprep.subr.mxu0 0.0
    %859 = vmatpush1.msra.mxu0 0.0
    %860 = vmatprep.subr.mxu0 0.0
    %861 = vmatpush1.msra.mxu0 0.0
    %862 = vmatprep.subr.mxu0 0.0
    %863 = vmatpush1.msra.mxu0 0.0
    %864 = vmatprep.subr.mxu0 0.0
    %865 = vmatpush1.msra.mxu0 0.0
    %866 = vmatprep.subr.mxu0 0.0
    %867 = vmatpush1.msra.mxu0 0.0
    %868 = vmatprep.subr.mxu0 0.0
    %869 = vmatpush1.msra.mxu0 0.0
    %870 = vmatprep.subr.mxu0 0.0
    %871 = vmatpush1.msra.mxu0 0.0
    %872 = vmatprep.subr.mxu0 0.0
    %873 = vmatpush1.msra.mxu0 0.0
    %874 = vmatprep.subr.mxu0 0.0
    %875 = vmatpush1.msra.mxu0 0.0
    %876 = vmatprep.subr.mxu0 0.0
    %877 = vmatpush1.msra.mxu0 0.0
    %878 = vmatprep.subr.mxu0 0.0
    %879 = vmatpush1.msra.mxu0 0.0
    %880 = vmatprep.subr.mxu0 0.0
    %881 = vmatpush1.msra.mxu0 0.0
    %882 = vmatprep.subr.mxu0 0.0
    %883 = vmatpush1.msra.mxu0 0.0
    %884 = vmatprep.subr.mxu0 0.0
    %885 = vmatpush1.msra.mxu0 0.0
    %886 = vmatprep.subr.mxu0 0.0
    %887 = vmatpush1.msra.mxu0 0.0
    %888 = vmatprep.subr.mxu0 0.0
    %889 = vmatpush1.msra.mxu0 0.0
    %890 = vmatprep.subr.mxu0 0.0
    %891 = vmatpush1.msra.mxu0 0.0
    %892 = vmatprep.subr.mxu0 0.0
    %893 = vmatpush1.msra.mxu0 0.0
    %894 = vmatprep.subr.mxu0 0.0
    %895 = vmatpush1.msra.mxu0 0.0
    %896 = vmatprep.mubr.f32.mxu0 0.0
    %897 = vmatmul.mubr.f32.gmra.mrb[0].mxu0 %v830
    %v898 = vpop.f32.mrb[0].mxu0
    %v899 = vadd.f32 %v827, %v898
    %v900 = vpop.f32.mrb[0].mxu0
    %901 = vdwg.mxu0
    %vm902 = vcmask 123904
    %903 = vst.msk [vmem:[#allocation11] sm:$0x3] %vm902, %v899
    // Predicated region
    $region62: #{branch_forward.1} parent=1 // pred_check
      _
    $region63: #{branch_forward.1} parent=1 // pred_check_branch
      %905 = sbr.rel (0) target = $region65
    $region64: #{branch_forward.1} parent=1 // pred_region
      %s907 = ssub.s32 32, 32
      %908 = vsyncadd [#allocation4], %s907
      %s910 = sshll.u32 [#allocation11], 4
      %s911 = int_to_ptr.vmem [resolvable:$true] %s910
      %913 = dma.vmem_to_hbm [thread:$0]  %s911, 32, %s11, [#allocation4]
    $region65: #{branch_forward.1} parent=1 // pred_fallthru
      _
    // Predicated region
    $region66: #{branch_forward.1} parent=1 // pred_check
      _
    $region67: #{branch_forward.1} parent=1 // pred_check_branch
      %915 = sbr.rel (0) target = $region69
    $region68: #{branch_forward.1} parent=1 // pred_region
      %916 = dma.done [#allocation4], 32
    $region69: #{branch_forward.1} parent=1 // pred_fallthru
      _
    %917 = vsyncpa [#allocation4], 1
    %918 = vsyncpa [#allocation5], 1
    %919 = vsyncpa [#allocation7], 1
    %920 = vsyncpa [#allocation10], 1

</llo_original>
